<compile_context>
chip_gen: v7x
topology: tpu7x:2x2x1
jax: 0.10.0
libtpu: 0.0.40
codegen_flags: <defaults>
</compile_context>

<pallas_src>
import math

import jax
import jax.numpy as jnp
from jax.experimental import pallas as pl
from jax.experimental.pallas import tpu as pltpu


MXU_DTYPE = jnp.bfloat16
ACC_DTYPE = jnp.float32


# --------------------------------------------------------------------------
# Kernel
# --------------------------------------------------------------------------
def _make_kernel(n_L, n_F, d, m, tb, boost_pool_max):
    """Build kernel closure for fixed layer counts / tiling (all static)."""

    def kernel(x_ref, *args):
        # args = [W_L0, b_L0, ..., W_F0, b_F0, ..., out_ref, g_scratch]
        *params, out_ref, g_scr = args
        L_params = params[: 2 * n_L]
        F_params = params[2 * n_L:]

        # (tb*n, din) bf16 block; rows ordered (example, boost-group, point).
        h = x_ref[...]

        # --- per-point MLP L: bf16 MXU matmuls, f32 accumulation -----------
        for li in range(n_L):
            w = L_params[2 * li][...]                   # bf16 (cin, cout)
            bvec = L_params[2 * li + 1][...]            # f32  (1, cout)
            acc = jnp.dot(h, w, preferred_element_type=ACC_DTYPE) + bvec
            if li < n_L - 1:
                h = jnp.maximum(acc, 0.0).astype(MXU_DTYPE)
            else:
                h = acc                                  # f32, feeds the pool

        # --- Pool: AdaptiveMaxPool2d((1, K)) == max over the m points ------
        K = h.shape[-1]
        fp = jnp.max(h.reshape(tb * d, m, K), axis=1)    # (tb*d, K), f32

        # --- MLP F: bf16 MXU matmuls, f32 accumulation ----------------------
        g = fp.astype(MXU_DTYPE)
        for li in range(n_F):
            w = F_params[2 * li][...]
            bvec = F_params[2 * li + 1][...]
            acc = jnp.dot(g, w, preferred_element_type=ACC_DTYPE) + bvec
            if li < n_F - 1:
                g = jnp.maximum(acc, 0.0).astype(MXU_DTYPE)
            else:
                g = acc                                  # f32

        # --- BoostPool: max (or mean) over the d boost groups ---------------
        # g rows are ordered (example, group); group j for every example lives
        # at rows j, j+d, j+2d, ...  Read them back with strided sublane loads
        # from a tiny VMEM scratch (avoids a sublane-splitting reshape).
        g_scr[...] = g                                   # (tb*d, out), f32
        y = g_scr[pl.ds(0, tb, stride=d), :]             # group 0, all examples
        if boost_pool_max:
            for j in range(1, d):
                y = jnp.maximum(y, g_scr[pl.ds(j, tb, stride=d), :])
        else:
            for j in range(1, d):
                y = y + g_scr[pl.ds(j, tb, stride=d), :]
            y = y * (1.0 / d)

        out_ref[...] = y.astype(out_ref.dtype)           # (tb, out)

    return kernel


# --------------------------------------------------------------------------
# Sizing helpers (lane-padding-aware, generation-aware)
# --------------------------------------------------------------------------
def _lane_pad(w):
    return -(-w // 128) * 128


def _sub_pad(r):
    return -(-r // 8) * 8


def _physical_vmem_bytes():
    """64 MiB on v7x, 128 MiB on v5e/v6e; conservative fallback if unknown."""
    try:
        info = pltpu.get_tpu_info()
        cap = getattr(info, "vmem_capacity_bytes", None)
        if cap:
            return int(cap)
    except Exception:
        pass
    return 64 * 1024 * 1024


def _param_vmem_bytes(params):
    total = 0
    for (w, bv) in params:
        cin, cout = w.shape
        total += _sub_pad(cin) * _lane_pad(cout) * 2               # bf16 weight
        total += _sub_pad(bv.shape[0]) * _lane_pad(cout) * 4       # f32 bias
    return 2 * total                                               # 2x buffered


def _estimate_vmem_bytes(tb, n, d, din, widths, out_dim, param_bytes):
    m_rows = tb * n
    in_block = 2 * _sub_pad(m_rows) * _lane_pad(din) * 2           # 2x bf16 input
    out_block = 2 * _sub_pad(tb) * _lane_pad(out_dim) * 4          # 2x f32 output
    w_pad = max([_lane_pad(w) for w in widths] + [_lane_pad(din)])
    act = m_rows * w_pad * (4 + 2 + 2)                             # f32 acc + bf16 in/out
    scratch = _sub_pad(tb * d) * _lane_pad(out_dim) * 4
    return in_block + out_block + act + scratch + param_bytes


def _choose_tb(b, n, d, din, widths, out_dim, budget, param_bytes, tb_req=None):
    # Target M = tb*n around 512-1024 rows per grid step.
    tb = max(1, 1024 // max(n, 1)) if tb_req is None else tb_req
    tb = max(1, min(tb, b))
    if b >= 8:
        tb = max(8, (tb // 8) * 8)

    # Cap by the lane-padded VMEM estimate (same budget as vmem_limit_bytes).
    while tb > 8 and _estimate_vmem_bytes(tb, n, d, din, widths, out_dim,
                                          param_bytes) > budget:
        tb = max(8, ((tb // 2) // 8) * 8)

    if b < 8:
        return b                                # single full-extent block

    def grid(t):
        return -(-b // t)

    # v7x: prefer an even grid >= 2 so both TensorCores get equal work.
    if grid(tb) == 1 and b >= 16:
        tb = max(8, (((b + 1) // 2 + 7) // 8) * 8)
    t = tb
    while grid(t) > 1 and grid(t) % 2 == 1 and t - 8 >= 8 and (t - 8) * n >= 256:
        t -= 8
    if grid(t) >= 2 and grid(t) % 2 == 0:
        tb = t
    return tb


# --------------------------------------------------------------------------
# Wrapper
# --------------------------------------------------------------------------
def boosted_pointnet_forward(x, L_params, F_params, boost_factor,
                             boost_pool_max=True, tb=None):
    """x: (b, n, din) float32.  L_params / F_params: lists of (W, b) pairs."""
    b, n, din = x.shape
    d = boost_factor
    m = n // d
    assert m * d == n, "n must be divisible by boost_factor"
    out_dim = F_params[-1][0].shape[1]
    all_params = list(L_params) + list(F_params)

    # Generation-aware VMEM budget, shared by tb selection and the limit.
    phys_vmem = _physical_vmem_bytes()
    vmem_limit = min(phys_vmem * 3 // 4, 100 * 1024 * 1024)
    budget = int(vmem_limit * 0.85)

    widths = [w.shape[1] for (w, _) in all_params]
    param_bytes = _param_vmem_bytes(all_params)
    tb = _choose_tb(b, n, d, din, widths, out_dim, budget, param_bytes, tb)
    n_steps = -(-b // tb)   # Pallas handles a partial last block (no x copy).

    # bf16 on the HBM path (halves the input DMA bytes); biases stay f32.
    x_flat = x.astype(MXU_DTYPE).reshape(b * n, din)

    in_specs = [pl.BlockSpec((tb * n, din), lambda i: (i, 0))]
    flat_params = []
    for (w, bv) in all_params:
        flat_params.append(w.astype(MXU_DTYPE))
        flat_params.append(bv.astype(jnp.float32))
        in_specs.append(pl.BlockSpec(w.shape, lambda i: (0, 0)))
        in_specs.append(pl.BlockSpec(bv.shape, lambda i: (0, 0)))

    kernel = _make_kernel(len(L_params), len(F_params), d, m, tb,
                          boost_pool_max)

    out = pl.pallas_call(
        kernel,
        out_shape=jax.ShapeDtypeStruct((b, out_dim), jnp.float32),
        grid=(n_steps,),
        in_specs=in_specs,
        out_specs=pl.BlockSpec((tb, out_dim), lambda i: (i, 0)),
        scratch_shapes=[pltpu.VMEM((tb * d, out_dim), jnp.float32)],
        compiler_params=pltpu.CompilerParams(
            dimension_semantics=("parallel",),
            vmem_limit_bytes=int(vmem_limit)),
    )(x_flat, *flat_params)
    return out


# --------------------------------------------------------------------------
# Parameter init (mirrors the PyTorch module) + pure-JAX reference
# --------------------------------------------------------------------------
def _xavier_relu_linear(key, cin, cout):
    """Deterministic xavier_uniform (relu gain) weight, zero bias."""
    gain = math.sqrt(2.0)
    bound = gain * math.sqrt(6.0 / (cin + cout))
    w = jax.random.uniform(key, (cin, cout), jnp.float32, -bound, bound)
    b = jnp.zeros((1, cout), jnp.float32)
    return w, b


def _make_mlp_params(key, dims):
    params = []
    for i in range(1, len(dims)):
        key, sub = jax.random.split(key)
        params.append(_xavier_relu_linear(sub, dims[i - 1], dims[i]))
    return params, key


def _reference_forward(x, L_params, F_params, boost_factor,
                       boost_pool_max=True):
    """Pure-JAX reference mirroring the PyTorch forward with the kernel's
    bf16-matmul / f32-accumulate / bf16-between-layers numerics."""
    b, n, din = x.shape
    d = boost_factor
    m = n // d
    h = x.astype(MXU_DTYPE).reshape(b, d, m, din)
    for li, (w, bv) in enumerate(L_params):
        acc = jnp.einsum("bdmi,io->bdmo", h, w.astype(MXU_DTYPE),
                         preferred_element_type=jnp.float32) + bv
        if li < len(L_params) - 1:
            h = jnp.maximum(acc, 0.0).astype(MXU_DTYPE)
        else:
            h = acc
    fp = jnp.max(h, axis=2)                      # (b, d, K), f32
    g = fp.astype(MXU_DTYPE)
    for li, (w, bv) in enumerate(F_params):
        acc = jnp.einsum("bdi,io->bdo", g, w.astype(MXU_DTYPE),
                         preferred_element_type=jnp.float32) + bv
        if li < len(F_params) - 1:
            g = jnp.maximum(acc, 0.0).astype(MXU_DTYPE)
        else:
            g = acc
    if boost_pool_max:
        return jnp.max(g, axis=1)                # (b, out)
    return jnp.mean(g, axis=1)


if __name__ == "__main__":
    # Module config: boost_factor=2, dims=[4, 32, 64], FC_dims=[64, 32, 16]
    boost_factor = 2
    dims = [4, 32, 64]
    FC_dims = [64, 32, 16]
    assert dims[-1] == FC_dims[0]

    key = jax.random.PRNGKey(0)
    L_params, key = _make_mlp_params(key, dims)
    F_params, key = _make_mlp_params(key, FC_dims)

    # batch=64 point clouds of n=16 points with 4 input channels (still tiny:
    # 4096 floats).  The wrapper auto-picks tb=32 -> M = tb*n = 512 rows per
    # matmul and a 2-step "parallel" grid (one step per v7x TensorCore).
    b, n, din = 64, 16, dims[0]
    key, sub = jax.random.split(key)
    x = jax.random.normal(sub, (b, n, din), dtype=jnp.float32)

    y = boosted_pointnet_forward(x, L_params, F_params, boost_factor,
                                 boost_pool_max=True)
    y = jax.block_until_ready(y)

    y_ref = _reference_forward(x, L_params, F_params, boost_factor,
                               boost_pool_max=True)
    assert y.shape == (b, FC_dims[-1])
    err = float(jnp.max(jnp.abs(y - y_ref)))
    assert jnp.allclose(y, y_ref, atol=1e-2, rtol=1e-2), err

    print("KERNEL_OK")
</pallas_src>

<mosaic_0001>
module attributes {stable_mosaic.version = 11 : i64} {
  func.func @kernel(%arg0: i32, %arg1: memref<512x4xbf16, #tpu.memory_space<vmem>>, %arg2: memref<4x32xbf16, #tpu.memory_space<vmem>>, %arg3: memref<1x32xf32, #tpu.memory_space<vmem>>, %arg4: memref<32x64xbf16, #tpu.memory_space<vmem>>, %arg5: memref<1x64xf32, #tpu.memory_space<vmem>>, %arg6: memref<64x32xbf16, #tpu.memory_space<vmem>>, %arg7: memref<1x32xf32, #tpu.memory_space<vmem>>, %arg8: memref<32x16xbf16, #tpu.memory_space<vmem>>, %arg9: memref<1x16xf32, #tpu.memory_space<vmem>>, %arg10: memref<32x16xf32, #tpu.memory_space<vmem>>, %arg11: memref<64x16xf32, #tpu.memory_space<vmem>>) attributes {dimension_semantics = [#tpu.dimension_semantics<parallel>], iteration_bounds = array<i64: 2>, scalar_prefetch = 0 : i64, scratch_operands = 1 : i64, tpu.core_type = #tpu.core_type<tc>, window_params = [{transform_indices = @transform_0, window_bounds = array<i64: 512, 4>}, {pipeline_mode = #tpu.pipeline_mode<synchronous>, transform_indices = @transform_1, window_bounds = array<i64: 4, 32>}, {pipeline_mode = #tpu.pipeline_mode<synchronous>, transform_indices = @transform_2, window_bounds = array<i64: 1, 32>}, {pipeline_mode = #tpu.pipeline_mode<synchronous>, transform_indices = @transform_3, window_bounds = array<i64: 32, 64>}, {pipeline_mode = #tpu.pipeline_mode<synchronous>, transform_indices = @transform_4, window_bounds = array<i64: 1, 64>}, {pipeline_mode = #tpu.pipeline_mode<synchronous>, transform_indices = @transform_5, window_bounds = array<i64: 64, 32>}, {pipeline_mode = #tpu.pipeline_mode<synchronous>, transform_indices = @transform_6, window_bounds = array<i64: 1, 32>}, {pipeline_mode = #tpu.pipeline_mode<synchronous>, transform_indices = @transform_7, window_bounds = array<i64: 32, 16>}, {pipeline_mode = #tpu.pipeline_mode<synchronous>, transform_indices = @transform_8, window_bounds = array<i64: 1, 16>}, {transform_indices = @transform_9, window_bounds = array<i64: 32, 16>}]} {
    %c0 = arith.constant 0 : index
    %c0_0 = arith.constant 0 : index
    %0 = vector.load %arg1[%c0, %c0_0] : memref<512x4xbf16, #tpu.memory_space<vmem>>, vector<512x4xbf16>
    %c0_1 = arith.constant 0 : index
    %c0_2 = arith.constant 0 : index
    %1 = vector.load %arg2[%c0_1, %c0_2] : memref<4x32xbf16, #tpu.memory_space<vmem>>, vector<4x32xbf16>
    %c0_3 = arith.constant 0 : index
    %c0_4 = arith.constant 0 : index
    %2 = vector.load %arg3[%c0_3, %c0_4] : memref<1x32xf32, #tpu.memory_space<vmem>>, vector<1x32xf32>
    %cst = arith.constant dense<0.000000e+00> : vector<512x32xf32>
    %3 = tpu.matmul %0, %1, %cst {dimension_numbers = #tpu.dot_dimension_numbers<[1], [0], [0], [1], [0, 0, 1, 1], [], []>} : vector<512x4xbf16>, vector<4x32xbf16>, vector<512x32xf32> -> vector<512x32xf32>
    %4 = vector.broadcast %2 : vector<1x32xf32> to vector<512x32xf32>
    %5 = arith.addf %3, %4 : vector<512x32xf32>
    %cst_5 = arith.constant 0.000000e+00 : f32
    %6 = vector.broadcast %cst_5 : f32 to vector<512x32xf32>
    %7 = arith.maximumf %5, %6 : vector<512x32xf32>
    %8 = arith.truncf %7 : vector<512x32xf32> to vector<512x32xbf16>
    %c0_6 = arith.constant 0 : index
    %c0_7 = arith.constant 0 : index
    %9 = vector.load %arg4[%c0_6, %c0_7] : memref<32x64xbf16, #tpu.memory_space<vmem>>, vector<32x64xbf16>
    %c0_8 = arith.constant 0 : index
    %c0_9 = arith.constant 0 : index
    %10 = vector.load %arg5[%c0_8, %c0_9] : memref<1x64xf32, #tpu.memory_space<vmem>>, vector<1x64xf32>
    %cst_10 = arith.constant dense<0.000000e+00> : vector<512x64xf32>
    %11 = tpu.matmul %8, %9, %cst_10 {dimension_numbers = #tpu.dot_dimension_numbers<[1], [0], [0], [1], [0, 0, 1, 1], [], []>} : vector<512x32xbf16>, vector<32x64xbf16>, vector<512x64xf32> -> vector<512x64xf32>
    %12 = vector.broadcast %10 : vector<1x64xf32> to vector<512x64xf32>
    %13 = arith.addf %11, %12 : vector<512x64xf32>
    %14 = vector.shape_cast %13 : vector<512x64xf32> to vector<64x8x64xf32>
    %cst_11 = arith.constant dense<0xFF800000> : vector<64x64xf32>
    %15 = vector.multi_reduction <maximumf>, %14, %cst_11 [1] : vector<64x8x64xf32> to vector<64x64xf32>
    %16 = arith.truncf %15 : vector<64x64xf32> to vector<64x64xbf16>
    %c0_12 = arith.constant 0 : index
    %c0_13 = arith.constant 0 : index
    %17 = vector.load %arg6[%c0_12, %c0_13] : memref<64x32xbf16, #tpu.memory_space<vmem>>, vector<64x32xbf16>
    %c0_14 = arith.constant 0 : index
    %c0_15 = arith.constant 0 : index
    %18 = vector.load %arg7[%c0_14, %c0_15] : memref<1x32xf32, #tpu.memory_space<vmem>>, vector<1x32xf32>
    %cst_16 = arith.constant dense<0.000000e+00> : vector<64x32xf32>
    %19 = tpu.matmul %16, %17, %cst_16 {dimension_numbers = #tpu.dot_dimension_numbers<[1], [0], [0], [1], [0, 0, 1, 1], [], []>} : vector<64x64xbf16>, vector<64x32xbf16>, vector<64x32xf32> -> vector<64x32xf32>
    %20 = vector.broadcast %18 : vector<1x32xf32> to vector<64x32xf32>
    %21 = arith.addf %19, %20 : vector<64x32xf32>
    %cst_17 = arith.constant 0.000000e+00 : f32
    %22 = vector.broadcast %cst_17 : f32 to vector<64x32xf32>
    %23 = arith.maximumf %21, %22 : vector<64x32xf32>
    %24 = arith.truncf %23 : vector<64x32xf32> to vector<64x32xbf16>
    %c0_18 = arith.constant 0 : index
    %c0_19 = arith.constant 0 : index
    %25 = vector.load %arg8[%c0_18, %c0_19] : memref<32x16xbf16, #tpu.memory_space<vmem>>, vector<32x16xbf16>
    %c0_20 = arith.constant 0 : index
    %c0_21 = arith.constant 0 : index
    %26 = vector.load %arg9[%c0_20, %c0_21] : memref<1x16xf32, #tpu.memory_space<vmem>>, vector<1x16xf32>
    %cst_22 = arith.constant dense<0.000000e+00> : vector<64x16xf32>
    %27 = tpu.matmul %24, %25, %cst_22 {dimension_numbers = #tpu.dot_dimension_numbers<[1], [0], [0], [1], [0, 0, 1, 1], [], []>} : vector<64x32xbf16>, vector<32x16xbf16>, vector<64x16xf32> -> vector<64x16xf32>
    %28 = vector.broadcast %26 : vector<1x16xf32> to vector<64x16xf32>
    %29 = arith.addf %27, %28 : vector<64x16xf32>
    %c0_23 = arith.constant 0 : index
    %c0_24 = arith.constant 0 : index
    %30 = vector.load %arg11[%c0_23, %c0_24] : memref<64x16xf32, #tpu.memory_space<vmem>>, vector<64x16xf32>
    tpu.vector_store %arg11[%c0_23, %c0_24], %29 {strides = array<i32>} : memref<64x16xf32, #tpu.memory_space<vmem>>, vector<64x16xf32>,
    %c0_25 = arith.constant 0 : index
    %c0_26 = arith.constant 0 : index
    %31 = tpu.strided_load %arg11[%c0_25, %c0_26] {strides = array<i32: 2, 1>} : memref<64x16xf32, #tpu.memory_space<vmem>>, vector<32x16xf32>
    %c1 = arith.constant 1 : index
    %c0_27 = arith.constant 0 : index
    %32 = tpu.strided_load %arg11[%c1, %c0_27] {strides = array<i32: 2, 1>} : memref<64x16xf32, #tpu.memory_space<vmem>>, vector<32x16xf32>
    %33 = arith.maximumf %31, %32 : vector<32x16xf32>
    %c0_28 = arith.constant 0 : index
    %c0_29 = arith.constant 0 : index
    %34 = vector.load %arg10[%c0_28, %c0_29] : memref<32x16xf32, #tpu.memory_space<vmem>>, vector<32x16xf32>
    tpu.vector_store %arg10[%c0_28, %c0_29], %33 {strides = array<i32>} : memref<32x16xf32, #tpu.memory_space<vmem>>, vector<32x16xf32>,
    return
  }
  func.func @transform_0(%arg0: i32) -> (i32, i32) {
    %c0_i32 = arith.constant 0 : i32
    %c0_i32_0 = arith.constant 0 : i32
    return %arg0, %c0_i32 : i32, i32
  }
  func.func @transform_1(%arg0: i32) -> (i32, i32) {
    %c0_i32 = arith.constant 0 : i32
    %c0_i32_0 = arith.constant 0 : i32
    %c0_i32_1 = arith.constant 0 : i32
    return %c0_i32, %c0_i32_0 : i32, i32
  }
  func.func @transform_2(%arg0: i32) -> (i32, i32) {
    %c0_i32 = arith.constant 0 : i32
    %c0_i32_0 = arith.constant 0 : i32
    %c0_i32_1 = arith.constant 0 : i32
    return %c0_i32, %c0_i32_0 : i32, i32
  }
  func.func @transform_3(%arg0: i32) -> (i32, i32) {
    %c0_i32 = arith.constant 0 : i32
    %c0_i32_0 = arith.constant 0 : i32
    %c0_i32_1 = arith.constant 0 : i32
    return %c0_i32, %c0_i32_0 : i32, i32
  }
  func.func @transform_4(%arg0: i32) -> (i32, i32) {
    %c0_i32 = arith.constant 0 : i32
    %c0_i32_0 = arith.constant 0 : i32
    %c0_i32_1 = arith.constant 0 : i32
    return %c0_i32, %c0_i32_0 : i32, i32
  }
  func.func @transform_5(%arg0: i32) -> (i32, i32) {
    %c0_i32 = arith.constant 0 : i32
    %c0_i32_0 = arith.constant 0 : i32
    %c0_i32_1 = arith.constant 0 : i32
    return %c0_i32, %c0_i32_0 : i32, i32
  }
  func.func @transform_6(%arg0: i32) -> (i32, i32) {
    %c0_i32 = arith.constant 0 : i32
    %c0_i32_0 = arith.constant 0 : i32
    %c0_i32_1 = arith.constant 0 : i32
    return %c0_i32, %c0_i32_0 : i32, i32
  }
  func.func @transform_7(%arg0: i32) -> (i32, i32) {
    %c0_i32 = arith.constant 0 : i32
    %c0_i32_0 = arith.constant 0 : i32
    %c0_i32_1 = arith.constant 0 : i32
    return %c0_i32, %c0_i32_0 : i32, i32
  }
  func.func @transform_8(%arg0: i32) -> (i32, i32) {
    %c0_i32 = arith.constant 0 : i32
    %c0_i32_0 = arith.constant 0 : i32
    %c0_i32_1 = arith.constant 0 : i32
    return %c0_i32, %c0_i32_0 : i32, i32
  }
  func.func @transform_9(%arg0: i32) -> (i32, i32) {
    %c0_i32 = arith.constant 0 : i32
    %c0_i32_0 = arith.constant 0 : i32
    return %arg0, %c0_i32 : i32, i32
  }
}

</mosaic_0001>

<llo_original>
// kernel: tpu_custom_call.1
$region0: #{tpu_custom_call.1}
  #allocation0 [shape = 'u32[]', space=smem, size = 0x4, offset = 0x4, fixed_abs, tag = 'smem constant byte address 0x4 - core index']
  #allocation1 [shape = 'u32[144,128]{1,0:T(1,128)}', space=vmem, size = 0x12000, scoped, tag = 'internal scratch']
  #allocation2 [shape = 'f32[64,16]{1,0:T(8,128)}', space=vmem, size = 0x8000, scoped, tag = 'scratch operand']
  %s0 = inlined_call_operand.vmem [shape: bf16[1024,4], index: 0, kind: input, shape index: {}]
  %s1 = inlined_call_operand.vmem [shape: bf16[4,32], index: 1, kind: input, shape index: {}]
  %s2 = inlined_call_operand.vmem [shape: f32[1,32], index: 2, kind: input, shape index: {}]
  %s3 = inlined_call_operand.vmem [shape: bf16[32,64], index: 3, kind: input, shape index: {}]
  %s4 = inlined_call_operand.vmem [shape: f32[1,64], index: 4, kind: input, shape index: {}]
  %s5 = inlined_call_operand.vmem [shape: bf16[64,32], index: 5, kind: input, shape index: {}]
  %s6 = inlined_call_operand.vmem [shape: f32[1,32], index: 6, kind: input, shape index: {}]
  %s7 = inlined_call_operand.vmem [shape: bf16[32,16], index: 7, kind: input, shape index: {}]
  %s8 = inlined_call_operand.vmem [shape: f32[1,16], index: 8, kind: input, shape index: {}]
  %s9 = inlined_call_operand.vmem [shape: f32[64,16], index: 9, kind: output, shape index: {}]
  %s10 = sld [smem:[#allocation0]]
  $region69: #{tpu_custom_call.1} parent=0
    _
  %s12 = ssub.s32 1, %s10
  %s13 = scalar_select 0, %s12, %s10
  loop: start=0, step=1, limit=4
  $region2: #{tpu_custom_call.1} parent=0 // loop_pre_header
    _
  $region3: #{tpu_custom_call.1} parent=0 // loop_header
    %s15 = sphi 0, %s19
    %p16 = scmp.ge.s32.totalorder %s15, 4
    %s25 = sphi 0, %s27
    %s28 = sphi 0, %s25
    %s29 = sphi 0, %s28
    %s45 = sphi 0, %s29
    %s49 = sphi 0, %s49
    %s51 = sphi 0, %s49
    %s52 = sphi 0, %s51
    %s66 = sphi 0, %s52
    %s70 = sphi 0, %s70
    %s72 = sphi 0, %s70
    %s73 = sphi 0, %s72
    %s87 = sphi 0, %s73
    %s91 = sphi 0, %s91
    %s93 = sphi 0, %s91
    %s94 = sphi 0, %s93
    %s108 = sphi 0, %s94
    %s112 = sphi 0, %s112
    %s114 = sphi 0, %s112
    %s115 = sphi 0, %s114
    %s129 = sphi 0, %s115
    %s133 = sphi 0, %s133
    %s135 = sphi 0, %s133
    %s136 = sphi 0, %s135
    %s150 = sphi 0, %s136
    %s154 = sphi 0, %s154
    %s156 = sphi 0, %s154
    %s157 = sphi 0, %s156
    %s171 = sphi 0, %s157
    %s175 = sphi 0, %s175
    %s177 = sphi 0, %s175
    %s178 = sphi 0, %s177
    %s192 = sphi 0, %s178
    %s196 = sphi 0, %s196
    %s198 = sphi 0, %s196
    %s199 = sphi 0, %s198
    %s213 = sphi 0, %s199
    %s219 = sphi 0, %s221
    %s222 = sphi 0, %s219
    %s223 = sphi 0, %s222
    %s239 = sphi 0, %s223
  $region4: #{tpu_custom_call.1} parent=0 // loop_header_branch
    %18 = sbr.rel (%p16) target = $region8
  $region5: #{tpu_custom_call.1} parent=0 // loop_body
    %s20 = ssub.s32 %s15, 1
    %s21 = ssub.s32 %s15, 2
    %s22 = sadd.s32 %s15, 1
    %s23 = ssub.s32 %s15, %s22
    %p24 = scmp.eq.s32.totalorder %s23, 0
    %s26 = sadd.s32 %s25, 1
    %s27 = scalar_select %p24, %s25, %s26
    %p30 = pneg %p24
    %p31 = scmp.eq.s32.totalorder %s15, 1
    %p32 = por %p30, %p31
    %p33 = scmp.ne.s32.totalorder %s25, %s28
    %p34 = scmp.eq.s32.totalorder %s15, 0
    %p35 = por %p33, %p34
    %p36 = scmp.ne.s32.totalorder %s25, %s28
    %p37 = scmp.eq.s32.totalorder %s20, 1
    %p38 = por %p36, %p37
    %p39 = scmp.ne.s32.totalorder %s28, %s29
    %p40 = scmp.eq.s32.totalorder %s20, 0
    %p41 = por %p39, %p40
    %p42 = scmp.ne.s32.totalorder %s28, %s29
    %p43 = scmp.eq.s32.totalorder %s21, 1
    %p44 = por %p42, %p43
    %p46 = scmp.ne.s32.totalorder %s29, %s45
    %p47 = scmp.eq.s32.totalorder %s21, 0
    %p48 = por %p46, %p47
    %s50 = sadd.s32 %s49, 1
    %p53 = scmp.eq.s32.totalorder %s15, 1
    %p54 = scmp.ne.s32.totalorder %s49, %s51
    %p55 = scmp.eq.s32.totalorder %s15, 0
    %p56 = por %p54, %p55
    %p57 = scmp.ne.s32.totalorder %s49, %s51
    %p58 = scmp.eq.s32.totalorder %s20, 1
    %p59 = por %p57, %p58
    %p60 = scmp.ne.s32.totalorder %s51, %s52
    %p61 = scmp.eq.s32.totalorder %s20, 0
    %p62 = por %p60, %p61
    %p63 = scmp.ne.s32.totalorder %s51, %s52
    %p64 = scmp.eq.s32.totalorder %s21, 1
    %p65 = por %p63, %p64
    %p67 = scmp.ne.s32.totalorder %s52, %s66
    %p68 = scmp.eq.s32.totalorder %s21, 0
    %p69 = por %p67, %p68
    %s71 = sadd.s32 %s70, 1
    %p74 = scmp.eq.s32.totalorder %s15, 1
    %p75 = scmp.ne.s32.totalorder %s70, %s72
    %p76 = scmp.eq.s32.totalorder %s15, 0
    %p77 = por %p75, %p76
    %p78 = scmp.ne.s32.totalorder %s70, %s72
    %p79 = scmp.eq.s32.totalorder %s20, 1
    %p80 = por %p78, %p79
    %p81 = scmp.ne.s32.totalorder %s72, %s73
    %p82 = scmp.eq.s32.totalorder %s20, 0
    %p83 = por %p81, %p82
    %p84 = scmp.ne.s32.totalorder %s72, %s73
    %p85 = scmp.eq.s32.totalorder %s21, 1
    %p86 = por %p84, %p85
    %p88 = scmp.ne.s32.totalorder %s73, %s87
    %p89 = scmp.eq.s32.totalorder %s21, 0
    %p90 = por %p88, %p89
    %s92 = sadd.s32 %s91, 1
    %p95 = scmp.eq.s32.totalorder %s15, 1
    %p96 = scmp.ne.s32.totalorder %s91, %s93
    %p97 = scmp.eq.s32.totalorder %s15, 0
    %p98 = por %p96, %p97
    %p99 = scmp.ne.s32.totalorder %s91, %s93
    %p100 = scmp.eq.s32.totalorder %s20, 1
    %p101 = por %p99, %p100
    %p102 = scmp.ne.s32.totalorder %s93, %s94
    %p103 = scmp.eq.s32.totalorder %s20, 0
    %p104 = por %p102, %p103
    %p105 = scmp.ne.s32.totalorder %s93, %s94
    %p106 = scmp.eq.s32.totalorder %s21, 1
    %p107 = por %p105, %p106
    %p109 = scmp.ne.s32.totalorder %s94, %s108
    %p110 = scmp.eq.s32.totalorder %s21, 0
    %p111 = por %p109, %p110
    %s113 = sadd.s32 %s112, 1
    %p116 = scmp.eq.s32.totalorder %s15, 1
    %p117 = scmp.ne.s32.totalorder %s112, %s114
    %p118 = scmp.eq.s32.totalorder %s15, 0
    %p119 = por %p117, %p118
    %p120 = scmp.ne.s32.totalorder %s112, %s114
    %p121 = scmp.eq.s32.totalorder %s20, 1
    %p122 = por %p120, %p121
    %p123 = scmp.ne.s32.totalorder %s114, %s115
    %p124 = scmp.eq.s32.totalorder %s20, 0
    %p125 = por %p123, %p124
    %p126 = scmp.ne.s32.totalorder %s114, %s115
    %p127 = scmp.eq.s32.totalorder %s21, 1
    %p128 = por %p126, %p127
    %p130 = scmp.ne.s32.totalorder %s115, %s129
    %p131 = scmp.eq.s32.totalorder %s21, 0
    %p132 = por %p130, %p131
    %s134 = sadd.s32 %s133, 1
    %p137 = scmp.eq.s32.totalorder %s15, 1
    %p138 = scmp.ne.s32.totalorder %s133, %s135
    %p139 = scmp.eq.s32.totalorder %s15, 0
    %p140 = por %p138, %p139
    %p141 = scmp.ne.s32.totalorder %s133, %s135
    %p142 = scmp.eq.s32.totalorder %s20, 1
    %p143 = por %p141, %p142
    %p144 = scmp.ne.s32.totalorder %s135, %s136
    %p145 = scmp.eq.s32.totalorder %s20, 0
    %p146 = por %p144, %p145
    %p147 = scmp.ne.s32.totalorder %s135, %s136
    %p148 = scmp.eq.s32.totalorder %s21, 1
    %p149 = por %p147, %p148
    %p151 = scmp.ne.s32.totalorder %s136, %s150
    %p152 = scmp.eq.s32.totalorder %s21, 0
    %p153 = por %p151, %p152
    %s155 = sadd.s32 %s154, 1
    %p158 = scmp.eq.s32.totalorder %s15, 1
    %p159 = scmp.ne.s32.totalorder %s154, %s156
    %p160 = scmp.eq.s32.totalorder %s15, 0
    %p161 = por %p159, %p160
    %p162 = scmp.ne.s32.totalorder %s154, %s156
    %p163 = scmp.eq.s32.totalorder %s20, 1
    %p164 = por %p162, %p163
    %p165 = scmp.ne.s32.totalorder %s156, %s157
    %p166 = scmp.eq.s32.totalorder %s20, 0
    %p167 = por %p165, %p166
    %p168 = scmp.ne.s32.totalorder %s156, %s157
    %p169 = scmp.eq.s32.totalorder %s21, 1
    %p170 = por %p168, %p169
    %p172 = scmp.ne.s32.totalorder %s157, %s171
    %p173 = scmp.eq.s32.totalorder %s21, 0
    %p174 = por %p172, %p173
    %s176 = sadd.s32 %s175, 1
    %p179 = scmp.eq.s32.totalorder %s15, 1
    %p180 = scmp.ne.s32.totalorder %s175, %s177
    %p181 = scmp.eq.s32.totalorder %s15, 0
    %p182 = por %p180, %p181
    %p183 = scmp.ne.s32.totalorder %s175, %s177
    %p184 = scmp.eq.s32.totalorder %s20, 1
    %p185 = por %p183, %p184
    %p186 = scmp.ne.s32.totalorder %s177, %s178
    %p187 = scmp.eq.s32.totalorder %s20, 0
    %p188 = por %p186, %p187
    %p189 = scmp.ne.s32.totalorder %s177, %s178
    %p190 = scmp.eq.s32.totalorder %s21, 1
    %p191 = por %p189, %p190
    %p193 = scmp.ne.s32.totalorder %s178, %s192
    %p194 = scmp.eq.s32.totalorder %s21, 0
    %p195 = por %p193, %p194
    %s197 = sadd.s32 %s196, 1
    %p200 = scmp.eq.s32.totalorder %s15, 1
    %p201 = scmp.ne.s32.totalorder %s196, %s198
    %p202 = scmp.eq.s32.totalorder %s15, 0
    %p203 = por %p201, %p202
    %p204 = scmp.ne.s32.totalorder %s196, %s198
    %p205 = scmp.eq.s32.totalorder %s20, 1
    %p206 = por %p204, %p205
    %p207 = scmp.ne.s32.totalorder %s198, %s199
    %p208 = scmp.eq.s32.totalorder %s20, 0
    %p209 = por %p207, %p208
    %p210 = scmp.ne.s32.totalorder %s198, %s199
    %p211 = scmp.eq.s32.totalorder %s21, 1
    %p212 = por %p210, %p211
    %p214 = scmp.ne.s32.totalorder %s199, %s213
    %p215 = scmp.eq.s32.totalorder %s21, 0
    %p216 = por %p214, %p215
    %s217 = ssub.s32 %s15, %s22
    %p218 = scmp.eq.s32.totalorder %s217, 0
    %s220 = sadd.s32 %s219, 1
    %s221 = scalar_select %p218, %s219, %s220
    %p224 = pneg %p218
    %p225 = scmp.eq.s32.totalorder %s15, 1
    %p226 = por %p224, %p225
    %p227 = scmp.ne.s32.totalorder %s219, %s222
    %p228 = scmp.eq.s32.totalorder %s15, 0
    %p229 = por %p227, %p228
    %p230 = scmp.ne.s32.totalorder %s219, %s222
    %p231 = scmp.eq.s32.totalorder %s20, 1
    %p232 = por %p230, %p231
    %p233 = scmp.ne.s32.totalorder %s222, %s223
    %p234 = scmp.eq.s32.totalorder %s20, 0
    %p235 = por %p233, %p234
    %p236 = scmp.ne.s32.totalorder %s222, %s223
    %p237 = scmp.eq.s32.totalorder %s21, 1
    %p238 = por %p236, %p237
    %p240 = scmp.ne.s32.totalorder %s223, %s239
    %p241 = scmp.eq.s32.totalorder %s21, 0
    %p242 = por %p240, %p241
    %p243 = scmp.le.s32.totalorder 1, %s15
    %p244 = scmp.lt.s32.totalorder %s15, 3
    %p245 = pnand %p243, %p244
    %p246 = pneg %p245
    // Predicated region
    $region9: #{tpu_custom_call.1} parent=5 // pred_check
      _
    $region10: #{tpu_custom_call.1} parent=5 // pred_check_branch
      %248 = sbr.rel (%p245) target = $region12
    $region11: #{tpu_custom_call.1} parent=5 // pred_region
      %s249 = ssub.s32 %s15, 1
      // Predicated region
      $region13: #{tpu_custom_call.1} parent=11 // pred_check
        %p250 = pneg %p62
      $region14: #{tpu_custom_call.1} parent=11 // pred_check_branch
        %252 = sbr.rel (%p250) target = $region16
      $region15: #{tpu_custom_call.1} parent=11 // pred_region
        _
      $region16: #{tpu_custom_call.1} parent=11 // pred_fallthru
        _
      // Predicated region
      $region17: #{tpu_custom_call.1} parent=11 // pred_check
        %p253 = pneg %p83
      $region18: #{tpu_custom_call.1} parent=11 // pred_check_branch
        %255 = sbr.rel (%p253) target = $region20
      $region19: #{tpu_custom_call.1} parent=11 // pred_region
        _
      $region20: #{tpu_custom_call.1} parent=11 // pred_fallthru
        _
      // Predicated region
      $region21: #{tpu_custom_call.1} parent=11 // pred_check
        %p256 = pneg %p104
      $region22: #{tpu_custom_call.1} parent=11 // pred_check_branch
        %258 = sbr.rel (%p256) target = $region24
      $region23: #{tpu_custom_call.1} parent=11 // pred_region
        _
      $region24: #{tpu_custom_call.1} parent=11 // pred_fallthru
        _
      // Predicated region
      $region25: #{tpu_custom_call.1} parent=11 // pred_check
        %p259 = pneg %p125
      $region26: #{tpu_custom_call.1} parent=11 // pred_check_branch
        %261 = sbr.rel (%p259) target = $region28
      $region27: #{tpu_custom_call.1} parent=11 // pred_region
        _
      $region28: #{tpu_custom_call.1} parent=11 // pred_fallthru
        _
      // Predicated region
      $region29: #{tpu_custom_call.1} parent=11 // pred_check
        %p262 = pneg %p146
      $region30: #{tpu_custom_call.1} parent=11 // pred_check_branch
        %264 = sbr.rel (%p262) target = $region32
      $region31: #{tpu_custom_call.1} parent=11 // pred_region
        _
      $region32: #{tpu_custom_call.1} parent=11 // pred_fallthru
        _
      // Predicated region
      $region33: #{tpu_custom_call.1} parent=11 // pred_check
        %p265 = pneg %p167
      $region34: #{tpu_custom_call.1} parent=11 // pred_check_branch
        %267 = sbr.rel (%p265) target = $region36
      $region35: #{tpu_custom_call.1} parent=11 // pred_region
        _
      $region36: #{tpu_custom_call.1} parent=11 // pred_fallthru
        _
      // Predicated region
      $region37: #{tpu_custom_call.1} parent=11 // pred_check
        %p268 = pneg %p188
      $region38: #{tpu_custom_call.1} parent=11 // pred_check_branch
        %270 = sbr.rel (%p268) target = $region40
      $region39: #{tpu_custom_call.1} parent=11 // pred_region
        _
      $region40: #{tpu_custom_call.1} parent=11 // pred_fallthru
        _
      // Predicated region
      $region41: #{tpu_custom_call.1} parent=11 // pred_check
        %p271 = pneg %p209
      $region42: #{tpu_custom_call.1} parent=11 // pred_check_branch
        %273 = sbr.rel (%p271) target = $region44
      $region43: #{tpu_custom_call.1} parent=11 // pred_region
        _
      $region44: #{tpu_custom_call.1} parent=11 // pred_fallthru
        _
    $region12: #{tpu_custom_call.1} parent=5 // pred_fallthru
      _
    %p274 = scmp.lt.s32.totalorder %s15, 2
    // Predicated region
    $region45: #{tpu_custom_call.1} parent=5 // pred_check
      %p275 = pneg %p274
    $region46: #{tpu_custom_call.1} parent=5 // pred_check_branch
      %277 = sbr.rel (%p275) target = $region48
    $region47: #{tpu_custom_call.1} parent=5 // pred_region
      // Predicated region
      $region49: #{tpu_custom_call.1} parent=47 // pred_check
        %p278 = pneg %p35
      $region50: #{tpu_custom_call.1} parent=47 // pred_check_branch
        %280 = sbr.rel (%p278) target = $region52
      $region51: #{tpu_custom_call.1} parent=47 // pred_region
        %s281 = smul.u32 64, %s15
        %p282 = scmp.lt.s32.totalorder %s281, 127
        %s283 = scalar_select %p282, %s281, 127
        %s284 = smul.addr %s283, 4
        %s285 = scalar_lea.vmem %s0, %s284
        %s286 = smul.u32 64, %s15
      $region52: #{tpu_custom_call.1} parent=47 // pred_fallthru
        _
    $region48: #{tpu_custom_call.1} parent=5 // pred_fallthru
      _
    %p287 = scmp.le.s32.totalorder 1, %s15
    %p288 = scmp.lt.s32.totalorder %s15, 3
    %p289 = pnand %p287, %p288
    %p290 = pneg %p289
    // Predicated region
    $region53: #{tpu_custom_call.1} parent=5 // pred_check
      _
    $region54: #{tpu_custom_call.1} parent=5 // pred_check_branch
      %292 = sbr.rel (%p289) target = $region56
    $region55: #{tpu_custom_call.1} parent=5 // pred_region
      %s293 = ssub.s32 %s15, 1
      %s294 = smul.u32 64, %s20
      %p295 = scmp.lt.s32.totalorder %s294, 127
      %s296 = scalar_select %p295, %s294, 127
      %s297 = smul.addr %s296, 4
      %s298 = scalar_lea.vmem %s0, %s297
      %p299 = pneg %p41
      %p300 = pneg %p38
      %p301 = pneg %p62
      %p302 = pneg %p59
      %p303 = pneg %p83
      %p304 = pneg %p80
      %p305 = pneg %p104
      %p306 = pneg %p101
      %p307 = pneg %p125
      %p308 = pneg %p122
      %p309 = pneg %p146
      %p310 = pneg %p143
      %p311 = pneg %p167
      %p312 = pneg %p164
      %p313 = pneg %p188
      %p314 = pneg %p185
      %p315 = pneg %p209
      %p316 = pneg %p206
      %p317 = pneg %p235
      %p318 = pneg %p232
      %s319 = smul.u32 4, %s20
      %p320 = scmp.lt.s32.totalorder %s319, 7
      %s321 = scalar_select %p320, %s319, 7
      %s322 = smul.addr %s321, 8
      %s323 = scalar_lea.vmem %s9, %s322
      %s324 = smul.u32 64, %s20
      %p325 = scmp.lt.s32.totalorder %s324, 127
      %s326 = scalar_select %p325, %s324, 127
      %s327 = smul.addr %s326, 4
      %s328 = scalar_lea.vmem %s0, %s327
      %s329 = smul.u32 64, %s20
      %s330 = smul.u32 4, %s20
      %p331 = scmp.lt.s32.totalorder %s330, 7
      %s332 = scalar_select %p331, %s330, 7
      %s333 = smul.addr %s332, 8
      %s334 = scalar_lea.vmem %s9, %s333
      %s335 = smul.u32 4, %s20
      %v337 = vld [vmem:[%s328] sm:$0xf]
      %v338 = vld [vmem:[%s328 + $0x4] sm:$0xf]
      %v339 = vld [vmem:[%s328 + $0x8] sm:$0xf]
      %v340 = vld [vmem:[%s328 + $0xc] sm:$0xf]
      %v341 = vld [vmem:[%s328 + $0x10] sm:$0xf]
      %v342 = vld [vmem:[%s328 + $0x14] sm:$0xf]
      %v343 = vld [vmem:[%s328 + $0x18] sm:$0xf]
      %v344 = vld [vmem:[%s328 + $0x1c] sm:$0xf]
      %v345 = vld [vmem:[%s328 + $0x20] sm:$0xf]
      %v346 = vld [vmem:[%s328 + $0x24] sm:$0xf]
      %v347 = vld [vmem:[%s328 + $0x28] sm:$0xf]
      %v348 = vld [vmem:[%s328 + $0x2c] sm:$0xf]
      %v349 = vld [vmem:[%s328 + $0x30] sm:$0xf]
      %v350 = vld [vmem:[%s328 + $0x34] sm:$0xf]
      %v351 = vld [vmem:[%s328 + $0x38] sm:$0xf]
      %v352 = vld [vmem:[%s328 + $0x3c] sm:$0xf]
      %v353 = vld [vmem:[%s328 + $0x40] sm:$0xf]
      %v354 = vld [vmem:[%s328 + $0x44] sm:$0xf]
      %v355 = vld [vmem:[%s328 + $0x48] sm:$0xf]
      %v356 = vld [vmem:[%s328 + $0x4c] sm:$0xf]
      %v357 = vld [vmem:[%s328 + $0x50] sm:$0xf]
      %v358 = vld [vmem:[%s328 + $0x54] sm:$0xf]
      %v359 = vld [vmem:[%s328 + $0x58] sm:$0xf]
      %v360 = vld [vmem:[%s328 + $0x5c] sm:$0xf]
      %v361 = vld [vmem:[%s328 + $0x60] sm:$0xf]
      %v362 = vld [vmem:[%s328 + $0x64] sm:$0xf]
      %v363 = vld [vmem:[%s328 + $0x68] sm:$0xf]
      %v364 = vld [vmem:[%s328 + $0x6c] sm:$0xf]
      %v365 = vld [vmem:[%s328 + $0x70] sm:$0xf]
      %v366 = vld [vmem:[%s328 + $0x74] sm:$0xf]
      %v367 = vld [vmem:[%s328 + $0x78] sm:$0xf]
      %v368 = vld [vmem:[%s328 + $0x7c] sm:$0xf]
      %v369 = vld [vmem:[%s328 + $0x80] sm:$0xf]
      %v370 = vld [vmem:[%s328 + $0x84] sm:$0xf]
      %v371 = vld [vmem:[%s328 + $0x88] sm:$0xf]
      %v372 = vld [vmem:[%s328 + $0x8c] sm:$0xf]
      %v373 = vld [vmem:[%s328 + $0x90] sm:$0xf]
      %v374 = vld [vmem:[%s328 + $0x94] sm:$0xf]
      %v375 = vld [vmem:[%s328 + $0x98] sm:$0xf]
      %v376 = vld [vmem:[%s328 + $0x9c] sm:$0xf]
      %v377 = vld [vmem:[%s328 + $0xa0] sm:$0xf]
      %v378 = vld [vmem:[%s328 + $0xa4] sm:$0xf]
      %v379 = vld [vmem:[%s328 + $0xa8] sm:$0xf]
      %v380 = vld [vmem:[%s328 + $0xac] sm:$0xf]
      %v381 = vld [vmem:[%s328 + $0xb0] sm:$0xf]
      %v382 = vld [vmem:[%s328 + $0xb4] sm:$0xf]
      %v383 = vld [vmem:[%s328 + $0xb8] sm:$0xf]
      %v384 = vld [vmem:[%s328 + $0xbc] sm:$0xf]
      %v385 = vld [vmem:[%s328 + $0xc0] sm:$0xf]
      %v386 = vld [vmem:[%s328 + $0xc4] sm:$0xf]
      %v387 = vld [vmem:[%s328 + $0xc8] sm:$0xf]
      %v388 = vld [vmem:[%s328 + $0xcc] sm:$0xf]
      %v389 = vld [vmem:[%s328 + $0xd0] sm:$0xf]
      %v390 = vld [vmem:[%s328 + $0xd4] sm:$0xf]
      %v391 = vld [vmem:[%s328 + $0xd8] sm:$0xf]
      %v392 = vld [vmem:[%s328 + $0xdc] sm:$0xf]
      %v393 = vld [vmem:[%s328 + $0xe0] sm:$0xf]
      %v394 = vld [vmem:[%s328 + $0xe4] sm:$0xf]
      %v395 = vld [vmem:[%s328 + $0xe8] sm:$0xf]
      %v396 = vld [vmem:[%s328 + $0xec] sm:$0xf]
      %v397 = vld [vmem:[%s328 + $0xf0] sm:$0xf]
      %v398 = vld [vmem:[%s328 + $0xf4] sm:$0xf]
      %v399 = vld [vmem:[%s328 + $0xf8] sm:$0xf]
      %v400 = vld [vmem:[%s328 + $0xfc] sm:$0xf]
      %v401 = vld [vmem:[%s1] sm:$0x3]
      %v402 = vld [vmem:[%s2] sm:$0x1]
      %v404 = vlaneseq
      %v405 = vshrl.u32 %v404, 7
      %v406 = vsub.s32 0, %v405
      %v407 = vrot.slane %v402, %v406
      %v473 = vunpack.c.l.b16 %v337
      %v474 = vunpack.c.l.b16 %v338
      %v475 = vunpack.c.l.b16 %v339
      %v476 = vunpack.c.l.b16 %v340
      %v477 = vunpack.c.l.b16 %v341
      %v478 = vunpack.c.l.b16 %v342
      %v479 = vunpack.c.l.b16 %v343
      %v480 = vunpack.c.l.b16 %v344
      %v481 = vunpack.c.l.b16 %v345
      %v482 = vunpack.c.l.b16 %v346
      %v483 = vunpack.c.l.b16 %v347
      %v484 = vunpack.c.l.b16 %v348
      %v485 = vunpack.c.l.b16 %v349
      %v486 = vunpack.c.l.b16 %v350
      %v487 = vunpack.c.l.b16 %v351
      %v488 = vunpack.c.l.b16 %v352
      %v489 = vunpack.c.l.b16 %v353
      %v490 = vunpack.c.l.b16 %v354
      %v491 = vunpack.c.l.b16 %v355
      %v492 = vunpack.c.l.b16 %v356
      %v493 = vunpack.c.l.b16 %v357
      %v494 = vunpack.c.l.b16 %v358
      %v495 = vunpack.c.l.b16 %v359
      %v496 = vunpack.c.l.b16 %v360
      %v497 = vunpack.c.l.b16 %v361
      %v498 = vunpack.c.l.b16 %v362
      %v499 = vunpack.c.l.b16 %v363
      %v500 = vunpack.c.l.b16 %v364
      %v501 = vunpack.c.l.b16 %v365
      %v502 = vunpack.c.l.b16 %v366
      %v503 = vunpack.c.l.b16 %v367
      %v504 = vunpack.c.l.b16 %v368
      %v505 = vunpack.c.l.b16 %v369
      %v506 = vunpack.c.l.b16 %v370
      %v507 = vunpack.c.l.b16 %v371
      %v508 = vunpack.c.l.b16 %v372
      %v509 = vunpack.c.l.b16 %v373
      %v510 = vunpack.c.l.b16 %v374
      %v511 = vunpack.c.l.b16 %v375
      %v512 = vunpack.c.l.b16 %v376
      %v513 = vunpack.c.l.b16 %v377
      %v514 = vunpack.c.l.b16 %v378
      %v515 = vunpack.c.l.b16 %v379
      %v516 = vunpack.c.l.b16 %v380
      %v517 = vunpack.c.l.b16 %v381
      %v518 = vunpack.c.l.b16 %v382
      %v519 = vunpack.c.l.b16 %v383
      %v520 = vunpack.c.l.b16 %v384
      %v521 = vunpack.c.l.b16 %v385
      %v522 = vunpack.c.l.b16 %v386
      %v523 = vunpack.c.l.b16 %v387
      %v524 = vunpack.c.l.b16 %v388
      %v525 = vunpack.c.l.b16 %v389
      %v526 = vunpack.c.l.b16 %v390
      %v527 = vunpack.c.l.b16 %v391
      %v528 = vunpack.c.l.b16 %v392
      %v529 = vunpack.c.l.b16 %v393
      %v530 = vunpack.c.l.b16 %v394
      %v531 = vunpack.c.l.b16 %v395
      %v532 = vunpack.c.l.b16 %v396
      %v533 = vunpack.c.l.b16 %v397
      %v534 = vunpack.c.l.b16 %v398
      %v535 = vunpack.c.l.b16 %v399
      %v536 = vunpack.c.l.b16 %v400
      %v537 = vpack.c.b16 %v474, %v473
      %v538 = vpack.c.b16 %v476, %v475
      %v539 = vpack.c.b16 %v478, %v477
      %v540 = vpack.c.b16 %v480, %v479
      %v541 = vpack.c.b16 %v482, %v481
      %v542 = vpack.c.b16 %v484, %v483
      %v543 = vpack.c.b16 %v486, %v485
      %v544 = vpack.c.b16 %v488, %v487
      %v545 = vpack.c.b16 %v490, %v489
      %v546 = vpack.c.b16 %v492, %v491
      %v547 = vpack.c.b16 %v494, %v493
      %v548 = vpack.c.b16 %v496, %v495
      %v549 = vpack.c.b16 %v498, %v497
      %v550 = vpack.c.b16 %v500, %v499
      %v551 = vpack.c.b16 %v502, %v501
      %v552 = vpack.c.b16 %v504, %v503
      %v553 = vpack.c.b16 %v506, %v505
      %v554 = vpack.c.b16 %v508, %v507
      %v555 = vpack.c.b16 %v510, %v509
      %v556 = vpack.c.b16 %v512, %v511
      %v557 = vpack.c.b16 %v514, %v513
      %v558 = vpack.c.b16 %v516, %v515
      %v559 = vpack.c.b16 %v518, %v517
      %v560 = vpack.c.b16 %v520, %v519
      %v561 = vpack.c.b16 %v522, %v521
      %v562 = vpack.c.b16 %v524, %v523
      %v563 = vpack.c.b16 %v526, %v525
      %v564 = vpack.c.b16 %v528, %v527
      %v565 = vpack.c.b16 %v530, %v529
      %v566 = vpack.c.b16 %v532, %v531
      %v567 = vpack.c.b16 %v534, %v533
      %v568 = vpack.c.b16 %v536, %v535
      %vm569 = vcmask 31744
      %v571 = vsel %vm569, %v537, 0
      %v574 = vsel %vm569, %v538, 0
      %v577 = vsel %vm569, %v539, 0
      %v580 = vsel %vm569, %v540, 0
      %v583 = vsel %vm569, %v541, 0
      %v586 = vsel %vm569, %v542, 0
      %v589 = vsel %vm569, %v543, 0
      %v592 = vsel %vm569, %v544, 0
      %v595 = vsel %vm569, %v545, 0
      %v598 = vsel %vm569, %v546, 0
      %v601 = vsel %vm569, %v547, 0
      %v604 = vsel %vm569, %v548, 0
      %v607 = vsel %vm569, %v549, 0
      %v610 = vsel %vm569, %v550, 0
      %v613 = vsel %vm569, %v551, 0
      %v616 = vsel %vm569, %v552, 0
      %v619 = vsel %vm569, %v553, 0
      %v622 = vsel %vm569, %v554, 0
      %v625 = vsel %vm569, %v555, 0
      %v628 = vsel %vm569, %v556, 0
      %v631 = vsel %vm569, %v557, 0
      %v634 = vsel %vm569, %v558, 0
      %v637 = vsel %vm569, %v559, 0
      %v640 = vsel %vm569, %v560, 0
      %v643 = vsel %vm569, %v561, 0
      %v646 = vsel %vm569, %v562, 0
      %v649 = vsel %vm569, %v563, 0
      %v652 = vsel %vm569, %v564, 0
      %v655 = vsel %vm569, %v565, 0
      %v658 = vsel %vm569, %v566, 0
      %v661 = vsel %vm569, %v567, 0
      %v664 = vsel %vm569, %v568, 0
      %vm666 = vcmask 1041408
      %v668 = vsel %vm666, %v401, 0
      %670 = vmatprep.subr.bf16.mxu0 0
      %671 = vmatpush1.bf16.msra.mxu0 %v668
      %672 = vmatprep.subr.bf16.mxu0 0
      %673 = vmatpush1.bf16.msra.mxu0 0
      %674 = vmatprep.subr.bf16.mxu0 0
      %675 = vmatpush1.bf16.msra.mxu0 0
      %676 = vmatprep.subr.bf16.mxu0 0
      %677 = vmatpush1.bf16.msra.mxu0 0
      %678 = vmatprep.subr.bf16.mxu0 0
      %679 = vmatpush1.bf16.msra.mxu0 0
      %680 = vmatprep.subr.bf16.mxu0 0
      %681 = vmatpush1.bf16.msra.mxu0 0
      %682 = vmatprep.subr.bf16.mxu0 0
      %683 = vmatpush1.bf16.msra.mxu0 0
      %684 = vmatprep.subr.bf16.mxu0 0
      %685 = vmatpush1.bf16.msra.mxu0 0
      %686 = vmatprep.subr.bf16.mxu0 0
      %687 = vmatpush1.bf16.msra.mxu0 0
      %688 = vmatprep.subr.bf16.mxu0 0
      %689 = vmatpush1.bf16.msra.mxu0 0
      %690 = vmatprep.subr.bf16.mxu0 0
      %691 = vmatpush1.bf16.msra.mxu0 0
      %692 = vmatprep.subr.bf16.mxu0 0
      %693 = vmatpush1.bf16.msra.mxu0 0
      %694 = vmatprep.subr.bf16.mxu0 0
      %695 = vmatpush1.bf16.msra.mxu0 0
      %696 = vmatprep.subr.bf16.mxu0 0
      %697 = vmatpush1.bf16.msra.mxu0 0
      %698 = vmatprep.subr.bf16.mxu0 0
      %699 = vmatpush1.bf16.msra.mxu0 0
      %700 = vmatprep.subr.bf16.mxu0 0
      %701 = vmatpush1.bf16.msra.mxu0 0
      %702 = vmatprep.mubr.bf16.mxu0 0
      %703 = vmatmul.mubr.bf16.gmra.mrb[0].mxu0 %v571
      %v704 = vpop.f32.mrb[0].mxu0
      %v705 = vadd.f32 %v407, %v704
      %v706 = vpop.f32.mrb[0].mxu0
      %v707 = vpop.f32.mrb[0].mxu0
      %v708 = vadd.f32 %v407, %v707
      %v709 = vpop.f32.mrb[0].mxu0
      %710 = vmatprep.mubr.bf16.mxu0 0
      %711 = vmatmul.mubr.bf16.gmra.mrb[0].mxu0 %v574
      %v712 = vpop.f32.mrb[0].mxu0
      %v713 = vadd.f32 %v407, %v712
      %v714 = vpop.f32.mrb[0].mxu0
      %v715 = vpop.f32.mrb[0].mxu0
      %v716 = vadd.f32 %v407, %v715
      %v717 = vpop.f32.mrb[0].mxu0
      %718 = vmatprep.mubr.bf16.mxu0 0
      %719 = vmatmul.mubr.bf16.gmra.mrb[0].mxu0 %v577
      %v720 = vpop.f32.mrb[0].mxu0
      %v721 = vadd.f32 %v407, %v720
      %v722 = vpop.f32.mrb[0].mxu0
      %v723 = vpop.f32.mrb[0].mxu0
      %v724 = vadd.f32 %v407, %v723
      %v725 = vpop.f32.mrb[0].mxu0
      %726 = vmatprep.mubr.bf16.mxu0 0
      %727 = vmatmul.mubr.bf16.gmra.mrb[0].mxu0 %v580
      %v728 = vpop.f32.mrb[0].mxu0
      %v729 = vadd.f32 %v407, %v728
      %v730 = vpop.f32.mrb[0].mxu0
      %v731 = vpop.f32.mrb[0].mxu0
      %v732 = vadd.f32 %v407, %v731
      %v733 = vpop.f32.mrb[0].mxu0
      %734 = vmatprep.mubr.bf16.mxu0 0
      %735 = vmatmul.mubr.bf16.gmra.mrb[0].mxu0 %v583
      %v736 = vpop.f32.mrb[0].mxu0
      %v737 = vadd.f32 %v407, %v736
      %v738 = vpop.f32.mrb[0].mxu0
      %v739 = vpop.f32.mrb[0].mxu0
      %v740 = vadd.f32 %v407, %v739
      %v741 = vpop.f32.mrb[0].mxu0
      %742 = vmatprep.mubr.bf16.mxu0 0
      %743 = vmatmul.mubr.bf16.gmra.mrb[0].mxu0 %v586
      %v744 = vpop.f32.mrb[0].mxu0
      %v745 = vadd.f32 %v407, %v744
      %v746 = vpop.f32.mrb[0].mxu0
      %v747 = vpop.f32.mrb[0].mxu0
      %v748 = vadd.f32 %v407, %v747
      %v749 = vpop.f32.mrb[0].mxu0
      %750 = vmatprep.mubr.bf16.mxu0 0
      %751 = vmatmul.mubr.bf16.gmra.mrb[0].mxu0 %v589
      %v752 = vpop.f32.mrb[0].mxu0
      %v753 = vadd.f32 %v407, %v752
      %v754 = vpop.f32.mrb[0].mxu0
      %v755 = vpop.f32.mrb[0].mxu0
      %v756 = vadd.f32 %v407, %v755
      %v757 = vpop.f32.mrb[0].mxu0
      %758 = vmatprep.mubr.bf16.mxu0 0
      %759 = vmatmul.mubr.bf16.gmra.mrb[0].mxu0 %v592
      %v760 = vpop.f32.mrb[0].mxu0
      %v761 = vadd.f32 %v407, %v760
      %v762 = vpop.f32.mrb[0].mxu0
      %v763 = vpop.f32.mrb[0].mxu0
      %v764 = vadd.f32 %v407, %v763
      %v765 = vpop.f32.mrb[0].mxu0
      %766 = vmatprep.mubr.bf16.mxu0 0
      %767 = vmatmul.mubr.bf16.gmra.mrb[0].mxu0 %v595
      %v768 = vpop.f32.mrb[0].mxu0
      %v769 = vadd.f32 %v407, %v768
      %v770 = vpop.f32.mrb[0].mxu0
      %v771 = vpop.f32.mrb[0].mxu0
      %v772 = vadd.f32 %v407, %v771
      %v773 = vpop.f32.mrb[0].mxu0
      %774 = vmatprep.mubr.bf16.mxu0 0
      %775 = vmatmul.mubr.bf16.gmra.mrb[0].mxu0 %v598
      %v776 = vpop.f32.mrb[0].mxu0
      %v777 = vadd.f32 %v407, %v776
      %v778 = vpop.f32.mrb[0].mxu0
      %v779 = vpop.f32.mrb[0].mxu0
      %v780 = vadd.f32 %v407, %v779
      %v781 = vpop.f32.mrb[0].mxu0
      %782 = vmatprep.mubr.bf16.mxu0 0
      %783 = vmatmul.mubr.bf16.gmra.mrb[0].mxu0 %v601
      %v784 = vpop.f32.mrb[0].mxu0
      %v785 = vadd.f32 %v407, %v784
      %v786 = vpop.f32.mrb[0].mxu0
      %v787 = vpop.f32.mrb[0].mxu0
      %v788 = vadd.f32 %v407, %v787
      %v789 = vpop.f32.mrb[0].mxu0
      %790 = vmatprep.mubr.bf16.mxu0 0
      %791 = vmatmul.mubr.bf16.gmra.mrb[0].mxu0 %v604
      %v792 = vpop.f32.mrb[0].mxu0
      %v793 = vadd.f32 %v407, %v792
      %v794 = vpop.f32.mrb[0].mxu0
      %v795 = vpop.f32.mrb[0].mxu0
      %v796 = vadd.f32 %v407, %v795
      %v797 = vpop.f32.mrb[0].mxu0
      %798 = vmatprep.mubr.bf16.mxu0 0
      %799 = vmatmul.mubr.bf16.gmra.mrb[0].mxu0 %v607
      %v800 = vpop.f32.mrb[0].mxu0
      %v801 = vadd.f32 %v407, %v800
      %v802 = vpop.f32.mrb[0].mxu0
      %v803 = vpop.f32.mrb[0].mxu0
      %v804 = vadd.f32 %v407, %v803
      %v805 = vpop.f32.mrb[0].mxu0
      %806 = vmatprep.mubr.bf16.mxu0 0
      %807 = vmatmul.mubr.bf16.gmra.mrb[0].mxu0 %v610
      %v808 = vpop.f32.mrb[0].mxu0
      %v809 = vadd.f32 %v407, %v808
      %v810 = vpop.f32.mrb[0].mxu0
      %v811 = vpop.f32.mrb[0].mxu0
      %v812 = vadd.f32 %v407, %v811
      %v813 = vpop.f32.mrb[0].mxu0
      %814 = vmatprep.mubr.bf16.mxu0 0
      %815 = vmatmul.mubr.bf16.gmra.mrb[0].mxu0 %v613
      %v816 = vpop.f32.mrb[0].mxu0
      %v817 = vadd.f32 %v407, %v816
      %v818 = vpop.f32.mrb[0].mxu0
      %v819 = vpop.f32.mrb[0].mxu0
      %v820 = vadd.f32 %v407, %v819
      %v821 = vpop.f32.mrb[0].mxu0
      %822 = vmatprep.mubr.bf16.mxu0 0
      %823 = vmatmul.mubr.bf16.gmra.mrb[0].mxu0 %v616
      %v824 = vpop.f32.mrb[0].mxu0
      %v825 = vadd.f32 %v407, %v824
      %v826 = vpop.f32.mrb[0].mxu0
      %v827 = vpop.f32.mrb[0].mxu0
      %v828 = vadd.f32 %v407, %v827
      %v829 = vpop.f32.mrb[0].mxu0
      %830 = vmatprep.mubr.bf16.mxu0 0
      %831 = vmatmul.mubr.bf16.gmra.mrb[0].mxu0 %v619
      %v832 = vpop.f32.mrb[0].mxu0
      %v833 = vadd.f32 %v407, %v832
      %v834 = vpop.f32.mrb[0].mxu0
      %v835 = vpop.f32.mrb[0].mxu0
      %v836 = vadd.f32 %v407, %v835
      %v837 = vpop.f32.mrb[0].mxu0
      %838 = vmatprep.mubr.bf16.mxu0 0
      %839 = vmatmul.mubr.bf16.gmra.mrb[0].mxu0 %v622
      %v840 = vpop.f32.mrb[0].mxu0
      %v841 = vadd.f32 %v407, %v840
      %v842 = vpop.f32.mrb[0].mxu0
      %v843 = vpop.f32.mrb[0].mxu0
      %v844 = vadd.f32 %v407, %v843
      %v845 = vpop.f32.mrb[0].mxu0
      %846 = vmatprep.mubr.bf16.mxu0 0
      %847 = vmatmul.mubr.bf16.gmra.mrb[0].mxu0 %v625
      %v848 = vpop.f32.mrb[0].mxu0
      %v849 = vadd.f32 %v407, %v848
      %v850 = vpop.f32.mrb[0].mxu0
      %v851 = vpop.f32.mrb[0].mxu0
      %v852 = vadd.f32 %v407, %v851
      %v853 = vpop.f32.mrb[0].mxu0
      %854 = vmatprep.mubr.bf16.mxu0 0
      %855 = vmatmul.mubr.bf16.gmra.mrb[0].mxu0 %v628
      %v856 = vpop.f32.mrb[0].mxu0
      %v857 = vadd.f32 %v407, %v856
      %v858 = vpop.f32.mrb[0].mxu0
      %v859 = vpop.f32.mrb[0].mxu0
      %v860 = vadd.f32 %v407, %v859
      %v861 = vpop.f32.mrb[0].mxu0
      %862 = vmatprep.mubr.bf16.mxu0 0
      %863 = vmatmul.mubr.bf16.gmra.mrb[0].mxu0 %v631
      %v864 = vpop.f32.mrb[0].mxu0
      %v865 = vadd.f32 %v407, %v864
      %v866 = vpop.f32.mrb[0].mxu0
      %v867 = vpop.f32.mrb[0].mxu0
      %v868 = vadd.f32 %v407, %v867
      %v869 = vpop.f32.mrb[0].mxu0
      %870 = vmatprep.mubr.bf16.mxu0 0
      %871 = vmatmul.mubr.bf16.gmra.mrb[0].mxu0 %v634
      %v872 = vpop.f32.mrb[0].mxu0
      %v873 = vadd.f32 %v407, %v872
      %v874 = vpop.f32.mrb[0].mxu0
      %v875 = vpop.f32.mrb[0].mxu0
      %v876 = vadd.f32 %v407, %v875
      %v877 = vpop.f32.mrb[0].mxu0
      %878 = vmatprep.mubr.bf16.mxu0 0
      %879 = vmatmul.mubr.bf16.gmra.mrb[0].mxu0 %v637
      %v880 = vpop.f32.mrb[0].mxu0
      %v881 = vadd.f32 %v407, %v880
      %v882 = vpop.f32.mrb[0].mxu0
      %v883 = vpop.f32.mrb[0].mxu0
      %v884 = vadd.f32 %v407, %v883
      %v885 = vpop.f32.mrb[0].mxu0
      %886 = vmatprep.mubr.bf16.mxu0 0
      %887 = vmatmul.mubr.bf16.gmra.mrb[0].mxu0 %v640
      %v888 = vpop.f32.mrb[0].mxu0
      %v889 = vadd.f32 %v407, %v888
      %v890 = vpop.f32.mrb[0].mxu0
      %v891 = vpop.f32.mrb[0].mxu0
      %v892 = vadd.f32 %v407, %v891
      %v893 = vpop.f32.mrb[0].mxu0
      %894 = vmatprep.mubr.bf16.mxu0 0
      %895 = vmatmul.mubr.bf16.gmra.mrb[0].mxu0 %v643
      %v896 = vpop.f32.mrb[0].mxu0
      %v897 = vadd.f32 %v407, %v896
      %v898 = vpop.f32.mrb[0].mxu0
      %v899 = vpop.f32.mrb[0].mxu0
      %v900 = vadd.f32 %v407, %v899
      %v901 = vpop.f32.mrb[0].mxu0
      %902 = vmatprep.mubr.bf16.mxu0 0
      %903 = vmatmul.mubr.bf16.gmra.mrb[0].mxu0 %v646
      %v904 = vpop.f32.mrb[0].mxu0
      %v905 = vadd.f32 %v407, %v904
      %v906 = vpop.f32.mrb[0].mxu0
      %v907 = vpop.f32.mrb[0].mxu0
      %v908 = vadd.f32 %v407, %v907
      %v909 = vpop.f32.mrb[0].mxu0
      %910 = vmatprep.mubr.bf16.mxu0 0
      %911 = vmatmul.mubr.bf16.gmra.mrb[0].mxu0 %v649
      %v912 = vpop.f32.mrb[0].mxu0
      %v913 = vadd.f32 %v407, %v912
      %v914 = vpop.f32.mrb[0].mxu0
      %v915 = vpop.f32.mrb[0].mxu0
      %v916 = vadd.f32 %v407, %v915
      %v917 = vpop.f32.mrb[0].mxu0
      %918 = vmatprep.mubr.bf16.mxu0 0
      %919 = vmatmul.mubr.bf16.gmra.mrb[0].mxu0 %v652
      %v920 = vpop.f32.mrb[0].mxu0
      %v921 = vadd.f32 %v407, %v920
      %v922 = vpop.f32.mrb[0].mxu0
      %v923 = vpop.f32.mrb[0].mxu0
      %v924 = vadd.f32 %v407, %v923
      %v925 = vpop.f32.mrb[0].mxu0
      %926 = vmatprep.mubr.bf16.mxu0 0
      %927 = vmatmul.mubr.bf16.gmra.mrb[0].mxu0 %v655
      %v928 = vpop.f32.mrb[0].mxu0
      %v929 = vadd.f32 %v407, %v928
      %v930 = vpop.f32.mrb[0].mxu0
      %v931 = vpop.f32.mrb[0].mxu0
      %v932 = vadd.f32 %v407, %v931
      %v933 = vpop.f32.mrb[0].mxu0
      %934 = vmatprep.mubr.bf16.mxu0 0
      %935 = vmatmul.mubr.bf16.gmra.mrb[0].mxu0 %v658
      %v936 = vpop.f32.mrb[0].mxu0
      %v937 = vadd.f32 %v407, %v936
      %v938 = vpop.f32.mrb[0].mxu0
      %v939 = vpop.f32.mrb[0].mxu0
      %v940 = vadd.f32 %v407, %v939
      %v941 = vpop.f32.mrb[0].mxu0
      %942 = vmatprep.mubr.bf16.mxu0 0
      %943 = vmatmul.mubr.bf16.gmra.mrb[0].mxu0 %v661
      %v944 = vpop.f32.mrb[0].mxu0
      %v945 = vadd.f32 %v407, %v944
      %v946 = vpop.f32.mrb[0].mxu0
      %v947 = vpop.f32.mrb[0].mxu0
      %v948 = vadd.f32 %v407, %v947
      %v949 = vpop.f32.mrb[0].mxu0
      %950 = vmatprep.mubr.bf16.mxu0 0
      %951 = vmatmul.mubr.bf16.gmra.mrb[0].mxu0 %v664
      %v952 = vpop.f32.mrb[0].mxu0
      %v953 = vadd.f32 %v407, %v952
      %v954 = vpop.f32.mrb[0].mxu0
      %v955 = vpop.f32.mrb[0].mxu0
      %v956 = vadd.f32 %v407, %v955
      %v957 = vpop.f32.mrb[0].mxu0
      %958 = vdwg.mxu0
      %v959 = vmax.f32 %v705, 0.0
      %v960 = vmax.f32 %v708, 0.0
      %v961 = vmax.f32 %v713, 0.0
      %v962 = vmax.f32 %v716, 0.0
      %v963 = vmax.f32 %v721, 0.0
      %v964 = vmax.f32 %v724, 0.0
      %v965 = vmax.f32 %v729, 0.0
      %v966 = vmax.f32 %v732, 0.0
      %v967 = vmax.f32 %v737, 0.0
      %v968 = vmax.f32 %v740, 0.0
      %v969 = vmax.f32 %v745, 0.0
      %v970 = vmax.f32 %v748, 0.0
      %v971 = vmax.f32 %v753, 0.0
      %v972 = vmax.f32 %v756, 0.0
      %v973 = vmax.f32 %v761, 0.0
      %v974 = vmax.f32 %v764, 0.0
      %v975 = vmax.f32 %v769, 0.0
      %v976 = vmax.f32 %v772, 0.0
      %v977 = vmax.f32 %v777, 0.0
      %v978 = vmax.f32 %v780, 0.0
      %v979 = vmax.f32 %v785, 0.0
      %v980 = vmax.f32 %v788, 0.0
      %v981 = vmax.f32 %v793, 0.0
      %v982 = vmax.f32 %v796, 0.0
      %v983 = vmax.f32 %v801, 0.0
      %v984 = vmax.f32 %v804, 0.0
      %v985 = vmax.f32 %v809, 0.0
      %v986 = vmax.f32 %v812, 0.0
      %v987 = vmax.f32 %v817, 0.0
      %v988 = vmax.f32 %v820, 0.0
      %v989 = vmax.f32 %v825, 0.0
      %v990 = vmax.f32 %v828, 0.0
      %v991 = vmax.f32 %v833, 0.0
      %v992 = vmax.f32 %v836, 0.0
      %v993 = vmax.f32 %v841, 0.0
      %v994 = vmax.f32 %v844, 0.0
      %v995 = vmax.f32 %v849, 0.0
      %v996 = vmax.f32 %v852, 0.0
      %v997 = vmax.f32 %v857, 0.0
      %v998 = vmax.f32 %v860, 0.0
      %v999 = vmax.f32 %v865, 0.0
      %v1000 = vmax.f32 %v868, 0.0
      %v1001 = vmax.f32 %v873, 0.0
      %v1002 = vmax.f32 %v876, 0.0
      %v1003 = vmax.f32 %v881, 0.0
      %v1004 = vmax.f32 %v884, 0.0
      %v1005 = vmax.f32 %v889, 0.0
      %v1006 = vmax.f32 %v892, 0.0
      %v1007 = vmax.f32 %v897, 0.0
      %v1008 = vmax.f32 %v900, 0.0
      %v1009 = vmax.f32 %v905, 0.0
      %v1010 = vmax.f32 %v908, 0.0
      %v1011 = vmax.f32 %v913, 0.0
      %v1012 = vmax.f32 %v916, 0.0
      %v1013 = vmax.f32 %v921, 0.0
      %v1014 = vmax.f32 %v924, 0.0
      %v1015 = vmax.f32 %v929, 0.0
      %v1016 = vmax.f32 %v932, 0.0
      %v1017 = vmax.f32 %v937, 0.0
      %v1018 = vmax.f32 %v940, 0.0
      %v1019 = vmax.f32 %v945, 0.0
      %v1020 = vmax.f32 %v948, 0.0
      %v1021 = vmax.f32 %v953, 0.0
      %v1022 = vmax.f32 %v956, 0.0
      %v1023 = vpack.c.bf16 %v960, %v959
      %v1024 = vpack.c.bf16 %v962, %v961
      %v1025 = vpack.c.bf16 %v964, %v963
      %v1026 = vpack.c.bf16 %v966, %v965
      %v1027 = vpack.c.bf16 %v968, %v967
      %v1028 = vpack.c.bf16 %v970, %v969
      %v1029 = vpack.c.bf16 %v972, %v971
      %v1030 = vpack.c.bf16 %v974, %v973
      %v1031 = vpack.c.bf16 %v976, %v975
      %v1032 = vpack.c.bf16 %v978, %v977
      %v1033 = vpack.c.bf16 %v980, %v979
      %v1034 = vpack.c.bf16 %v982, %v981
      %v1035 = vpack.c.bf16 %v984, %v983
      %v1036 = vpack.c.bf16 %v986, %v985
      %v1037 = vpack.c.bf16 %v988, %v987
      %v1038 = vpack.c.bf16 %v990, %v989
      %v1039 = vpack.c.bf16 %v992, %v991
      %v1040 = vpack.c.bf16 %v994, %v993
      %v1041 = vpack.c.bf16 %v996, %v995
      %v1042 = vpack.c.bf16 %v998, %v997
      %v1043 = vpack.c.bf16 %v1000, %v999
      %v1044 = vpack.c.bf16 %v1002, %v1001
      %v1045 = vpack.c.bf16 %v1004, %v1003
      %v1046 = vpack.c.bf16 %v1006, %v1005
      %v1047 = vpack.c.bf16 %v1008, %v1007
      %v1048 = vpack.c.bf16 %v1010, %v1009
      %v1049 = vpack.c.bf16 %v1012, %v1011
      %v1050 = vpack.c.bf16 %v1014, %v1013
      %v1051 = vpack.c.bf16 %v1016, %v1015
      %v1052 = vpack.c.bf16 %v1018, %v1017
      %v1053 = vpack.c.bf16 %v1020, %v1019
      %v1054 = vpack.c.bf16 %v1022, %v1021
      %v1055 = vld [vmem:[%s3] sm:$0xf]
      %v1056 = vld [vmem:[%s3 + $0x4] sm:$0xf]
      %v1057 = vld [vmem:[%s3 + $0x8] sm:$0xf]
      %v1058 = vld [vmem:[%s3 + $0xc] sm:$0xf]
      %v1059 = vld [vmem:[%s4] sm:$0x1]
      %v1061 = vlaneseq
      %v1062 = vshrl.u32 %v1061, 7
      %v1063 = vsub.s32 0, %v1062
      %v1064 = vrot.slane %v1059, %v1063
      %v1070 = vunpack.c.l.b16 %v1055
      %v1071 = vunpack.c.l.b16 %v1056
      %v1072 = vunpack.c.l.b16 %v1057
      %v1073 = vunpack.c.l.b16 %v1058
      %v1074 = vpack.c.b16 %v1071, %v1070
      %v1075 = vpack.c.b16 %v1073, %v1072
      %vm1078 = vcmask 261120
      %v1080 = vsel %vm1078, %v1023, 0
      %v1083 = vsel %vm1078, %v1024, 0
      %v1086 = vsel %vm1078, %v1025, 0
      %v1089 = vsel %vm1078, %v1026, 0
      %v1092 = vsel %vm1078, %v1027, 0
      %v1095 = vsel %vm1078, %v1028, 0
      %v1098 = vsel %vm1078, %v1029, 0
      %v1101 = vsel %vm1078, %v1030, 0
      %v1104 = vsel %vm1078, %v1031, 0
      %v1107 = vsel %vm1078, %v1032, 0
      %v1110 = vsel %vm1078, %v1033, 0
      %v1113 = vsel %vm1078, %v1034, 0
      %v1116 = vsel %vm1078, %v1035, 0
      %v1119 = vsel %vm1078, %v1036, 0
      %v1122 = vsel %vm1078, %v1037, 0
      %v1125 = vsel %vm1078, %v1038, 0
      %v1128 = vsel %vm1078, %v1039, 0
      %v1131 = vsel %vm1078, %v1040, 0
      %v1134 = vsel %vm1078, %v1041, 0
      %v1137 = vsel %vm1078, %v1042, 0
      %v1140 = vsel %vm1078, %v1043, 0
      %v1143 = vsel %vm1078, %v1044, 0
      %v1146 = vsel %vm1078, %v1045, 0
      %v1149 = vsel %vm1078, %v1046, 0
      %v1152 = vsel %vm1078, %v1047, 0
      %v1155 = vsel %vm1078, %v1048, 0
      %v1158 = vsel %vm1078, %v1049, 0
      %v1161 = vsel %vm1078, %v1050, 0
      %v1164 = vsel %vm1078, %v1051, 0
      %v1167 = vsel %vm1078, %v1052, 0
      %v1170 = vsel %vm1078, %v1053, 0
      %v1173 = vsel %vm1078, %v1054, 0
      %1175 = vmatprep.subr.bf16.mxu0 0
      %1176 = vmatpush1.bf16.msra.mxu0 %v1074
      %1177 = vmatprep.subr.bf16.mxu0 0
      %1178 = vmatpush1.bf16.msra.mxu0 %v1075
      %1179 = vmatprep.subr.bf16.mxu0 0
      %1180 = vmatpush1.bf16.msra.mxu0 0
      %1181 = vmatprep.subr.bf16.mxu0 0
      %1182 = vmatpush1.bf16.msra.mxu0 0
      %1183 = vmatprep.subr.bf16.mxu0 0
      %1184 = vmatpush1.bf16.msra.mxu0 0
      %1185 = vmatprep.subr.bf16.mxu0 0
      %1186 = vmatpush1.bf16.msra.mxu0 0
      %1187 = vmatprep.subr.bf16.mxu0 0
      %1188 = vmatpush1.bf16.msra.mxu0 0
      %1189 = vmatprep.subr.bf16.mxu0 0
      %1190 = vmatpush1.bf16.msra.mxu0 0
      %1191 = vmatprep.subr.bf16.mxu0 0
      %1192 = vmatpush1.bf16.msra.mxu0 0
      %1193 = vmatprep.subr.bf16.mxu0 0
      %1194 = vmatpush1.bf16.msra.mxu0 0
      %1195 = vmatprep.subr.bf16.mxu0 0
      %1196 = vmatpush1.bf16.msra.mxu0 0
      %1197 = vmatprep.subr.bf16.mxu0 0
      %1198 = vmatpush1.bf16.msra.mxu0 0
      %1199 = vmatprep.subr.bf16.mxu0 0
      %1200 = vmatpush1.bf16.msra.mxu0 0
      %1201 = vmatprep.subr.bf16.mxu0 0
      %1202 = vmatpush1.bf16.msra.mxu0 0
      %1203 = vmatprep.subr.bf16.mxu0 0
      %1204 = vmatpush1.bf16.msra.mxu0 0
      %1205 = vmatprep.subr.bf16.mxu0 0
      %1206 = vmatpush1.bf16.msra.mxu0 0
      %1207 = vmatprep.mubr.bf16.mxu0 0
      %1208 = vmatmul.mubr.bf16.gmra.mrb[0].mxu0 %v1080
      %v1209 = vpop.f32.mrb[0].mxu0
      %v1210 = vadd.f32 %v1064, %v1209
      %v1211 = vpop.f32.mrb[0].mxu0
      %v1212 = vpop.f32.mrb[0].mxu0
      %v1213 = vadd.f32 %v1064, %v1212
      %v1214 = vpop.f32.mrb[0].mxu0
      %1215 = vmatprep.mubr.bf16.mxu0 0
      %1216 = vmatmul.mubr.bf16.gmra.mrb[0].mxu0 %v1083
      %v1217 = vpop.f32.mrb[0].mxu0
      %v1218 = vadd.f32 %v1064, %v1217
      %v1219 = vpop.f32.mrb[0].mxu0
      %v1220 = vpop.f32.mrb[0].mxu0
      %v1221 = vadd.f32 %v1064, %v1220
      %v1222 = vpop.f32.mrb[0].mxu0
      %1223 = vmatprep.mubr.bf16.mxu0 0
      %1224 = vmatmul.mubr.bf16.gmra.mrb[0].mxu0 %v1086
      %v1225 = vpop.f32.mrb[0].mxu0
      %v1226 = vadd.f32 %v1064, %v1225
      %v1227 = vpop.f32.mrb[0].mxu0
      %v1228 = vpop.f32.mrb[0].mxu0
      %v1229 = vadd.f32 %v1064, %v1228
      %v1230 = vpop.f32.mrb[0].mxu0
      %1231 = vmatprep.mubr.bf16.mxu0 0
      %1232 = vmatmul.mubr.bf16.gmra.mrb[0].mxu0 %v1089
      %v1233 = vpop.f32.mrb[0].mxu0
      %v1234 = vadd.f32 %v1064, %v1233
      %v1235 = vpop.f32.mrb[0].mxu0
      %v1236 = vpop.f32.mrb[0].mxu0
      %v1237 = vadd.f32 %v1064, %v1236
      %v1238 = vpop.f32.mrb[0].mxu0
      %1239 = vmatprep.mubr.bf16.mxu0 0
      %1240 = vmatmul.mubr.bf16.gmra.mrb[0].mxu0 %v1092
      %v1241 = vpop.f32.mrb[0].mxu0
      %v1242 = vadd.f32 %v1064, %v1241
      %v1243 = vpop.f32.mrb[0].mxu0
      %v1244 = vpop.f32.mrb[0].mxu0
      %v1245 = vadd.f32 %v1064, %v1244
      %v1246 = vpop.f32.mrb[0].mxu0
      %1247 = vmatprep.mubr.bf16.mxu0 0
      %1248 = vmatmul.mubr.bf16.gmra.mrb[0].mxu0 %v1095
      %v1249 = vpop.f32.mrb[0].mxu0
      %v1250 = vadd.f32 %v1064, %v1249
      %v1251 = vpop.f32.mrb[0].mxu0
      %v1252 = vpop.f32.mrb[0].mxu0
      %v1253 = vadd.f32 %v1064, %v1252
      %v1254 = vpop.f32.mrb[0].mxu0
      %1255 = vmatprep.mubr.bf16.mxu0 0
      %1256 = vmatmul.mubr.bf16.gmra.mrb[0].mxu0 %v1098
      %v1257 = vpop.f32.mrb[0].mxu0
      %v1258 = vadd.f32 %v1064, %v1257
      %v1259 = vpop.f32.mrb[0].mxu0
      %v1260 = vpop.f32.mrb[0].mxu0
      %v1261 = vadd.f32 %v1064, %v1260
      %v1262 = vpop.f32.mrb[0].mxu0
      %1263 = vmatprep.mubr.bf16.mxu0 0
      %1264 = vmatmul.mubr.bf16.gmra.mrb[0].mxu0 %v1101
      %v1265 = vpop.f32.mrb[0].mxu0
      %v1266 = vadd.f32 %v1064, %v1265
      %v1267 = vpop.f32.mrb[0].mxu0
      %v1268 = vpop.f32.mrb[0].mxu0
      %v1269 = vadd.f32 %v1064, %v1268
      %v1270 = vpop.f32.mrb[0].mxu0
      %1271 = vmatprep.mubr.bf16.mxu0 0
      %1272 = vmatmul.mubr.bf16.gmra.mrb[0].mxu0 %v1104
      %v1273 = vpop.f32.mrb[0].mxu0
      %v1274 = vadd.f32 %v1064, %v1273
      %v1275 = vpop.f32.mrb[0].mxu0
      %v1276 = vpop.f32.mrb[0].mxu0
      %v1277 = vadd.f32 %v1064, %v1276
      %v1278 = vpop.f32.mrb[0].mxu0
      %1279 = vmatprep.mubr.bf16.mxu0 0
      %1280 = vmatmul.mubr.bf16.gmra.mrb[0].mxu0 %v1107
      %v1281 = vpop.f32.mrb[0].mxu0
      %v1282 = vadd.f32 %v1064, %v1281
      %v1283 = vpop.f32.mrb[0].mxu0
      %v1284 = vpop.f32.mrb[0].mxu0
      %v1285 = vadd.f32 %v1064, %v1284
      %v1286 = vpop.f32.mrb[0].mxu0
      %1287 = vmatprep.mubr.bf16.mxu0 0
      %1288 = vmatmul.mubr.bf16.gmra.mrb[0].mxu0 %v1110
      %v1289 = vpop.f32.mrb[0].mxu0
      %v1290 = vadd.f32 %v1064, %v1289
      %v1291 = vpop.f32.mrb[0].mxu0
      %v1292 = vpop.f32.mrb[0].mxu0
      %v1293 = vadd.f32 %v1064, %v1292
      %v1294 = vpop.f32.mrb[0].mxu0
      %1295 = vmatprep.mubr.bf16.mxu0 0
      %1296 = vmatmul.mubr.bf16.gmra.mrb[0].mxu0 %v1113
      %v1297 = vpop.f32.mrb[0].mxu0
      %v1298 = vadd.f32 %v1064, %v1297
      %v1299 = vpop.f32.mrb[0].mxu0
      %v1300 = vpop.f32.mrb[0].mxu0
      %v1301 = vadd.f32 %v1064, %v1300
      %v1302 = vpop.f32.mrb[0].mxu0
      %1303 = vmatprep.mubr.bf16.mxu0 0
      %1304 = vmatmul.mubr.bf16.gmra.mrb[0].mxu0 %v1116
      %v1305 = vpop.f32.mrb[0].mxu0
      %v1306 = vadd.f32 %v1064, %v1305
      %v1307 = vpop.f32.mrb[0].mxu0
      %v1308 = vpop.f32.mrb[0].mxu0
      %v1309 = vadd.f32 %v1064, %v1308
      %v1310 = vpop.f32.mrb[0].mxu0
      %1311 = vmatprep.mubr.bf16.mxu0 0
      %1312 = vmatmul.mubr.bf16.gmra.mrb[0].mxu0 %v1119
      %v1313 = vpop.f32.mrb[0].mxu0
      %v1314 = vadd.f32 %v1064, %v1313
      %v1315 = vpop.f32.mrb[0].mxu0
      %v1316 = vpop.f32.mrb[0].mxu0
      %v1317 = vadd.f32 %v1064, %v1316
      %v1318 = vpop.f32.mrb[0].mxu0
      %1319 = vmatprep.mubr.bf16.mxu0 0
      %1320 = vmatmul.mubr.bf16.gmra.mrb[0].mxu0 %v1122
      %v1321 = vpop.f32.mrb[0].mxu0
      %v1322 = vadd.f32 %v1064, %v1321
      %v1323 = vpop.f32.mrb[0].mxu0
      %v1324 = vpop.f32.mrb[0].mxu0
      %v1325 = vadd.f32 %v1064, %v1324
      %v1326 = vpop.f32.mrb[0].mxu0
      %1327 = vmatprep.mubr.bf16.mxu0 0
      %1328 = vmatmul.mubr.bf16.gmra.mrb[0].mxu0 %v1125
      %v1329 = vpop.f32.mrb[0].mxu0
      %v1330 = vadd.f32 %v1064, %v1329
      %v1331 = vpop.f32.mrb[0].mxu0
      %v1332 = vpop.f32.mrb[0].mxu0
      %v1333 = vadd.f32 %v1064, %v1332
      %v1334 = vpop.f32.mrb[0].mxu0
      %1335 = vmatprep.mubr.bf16.mxu0 0
      %1336 = vmatmul.mubr.bf16.gmra.mrb[0].mxu0 %v1128
      %v1337 = vpop.f32.mrb[0].mxu0
      %v1338 = vadd.f32 %v1064, %v1337
      %v1339 = vpop.f32.mrb[0].mxu0
      %v1340 = vpop.f32.mrb[0].mxu0
      %v1341 = vadd.f32 %v1064, %v1340
      %v1342 = vpop.f32.mrb[0].mxu0
      %1343 = vmatprep.mubr.bf16.mxu0 0
      %1344 = vmatmul.mubr.bf16.gmra.mrb[0].mxu0 %v1131
      %v1345 = vpop.f32.mrb[0].mxu0
      %v1346 = vadd.f32 %v1064, %v1345
      %v1347 = vpop.f32.mrb[0].mxu0
      %v1348 = vpop.f32.mrb[0].mxu0
      %v1349 = vadd.f32 %v1064, %v1348
      %v1350 = vpop.f32.mrb[0].mxu0
      %1351 = vmatprep.mubr.bf16.mxu0 0
      %1352 = vmatmul.mubr.bf16.gmra.mrb[0].mxu0 %v1134
      %v1353 = vpop.f32.mrb[0].mxu0
      %v1354 = vadd.f32 %v1064, %v1353
      %v1355 = vpop.f32.mrb[0].mxu0
      %v1356 = vpop.f32.mrb[0].mxu0
      %v1357 = vadd.f32 %v1064, %v1356
      %v1358 = vpop.f32.mrb[0].mxu0
      %1359 = vmatprep.mubr.bf16.mxu0 0
      %1360 = vmatmul.mubr.bf16.gmra.mrb[0].mxu0 %v1137
      %v1361 = vpop.f32.mrb[0].mxu0
      %v1362 = vadd.f32 %v1064, %v1361
      %v1363 = vpop.f32.mrb[0].mxu0
      %v1364 = vpop.f32.mrb[0].mxu0
      %v1365 = vadd.f32 %v1064, %v1364
      %v1366 = vpop.f32.mrb[0].mxu0
      %1367 = vmatprep.mubr.bf16.mxu0 0
      %1368 = vmatmul.mubr.bf16.gmra.mrb[0].mxu0 %v1140
      %v1369 = vpop.f32.mrb[0].mxu0
      %v1370 = vadd.f32 %v1064, %v1369
      %v1371 = vpop.f32.mrb[0].mxu0
      %v1372 = vpop.f32.mrb[0].mxu0
      %v1373 = vadd.f32 %v1064, %v1372
      %v1374 = vpop.f32.mrb[0].mxu0
      %1375 = vmatprep.mubr.bf16.mxu0 0
      %1376 = vmatmul.mubr.bf16.gmra.mrb[0].mxu0 %v1143
      %v1377 = vpop.f32.mrb[0].mxu0
      %v1378 = vadd.f32 %v1064, %v1377
      %v1379 = vpop.f32.mrb[0].mxu0
      %v1380 = vpop.f32.mrb[0].mxu0
      %v1381 = vadd.f32 %v1064, %v1380
      %v1382 = vpop.f32.mrb[0].mxu0
      %1383 = vmatprep.mubr.bf16.mxu0 0
      %1384 = vmatmul.mubr.bf16.gmra.mrb[0].mxu0 %v1146
      %v1385 = vpop.f32.mrb[0].mxu0
      %v1386 = vadd.f32 %v1064, %v1385
      %v1387 = vpop.f32.mrb[0].mxu0
      %v1388 = vpop.f32.mrb[0].mxu0
      %v1389 = vadd.f32 %v1064, %v1388
      %v1390 = vpop.f32.mrb[0].mxu0
      %1391 = vmatprep.mubr.bf16.mxu0 0
      %1392 = vmatmul.mubr.bf16.gmra.mrb[0].mxu0 %v1149
      %v1393 = vpop.f32.mrb[0].mxu0
      %v1394 = vadd.f32 %v1064, %v1393
      %v1395 = vpop.f32.mrb[0].mxu0
      %v1396 = vpop.f32.mrb[0].mxu0
      %v1397 = vadd.f32 %v1064, %v1396
      %v1398 = vpop.f32.mrb[0].mxu0
      %1399 = vmatprep.mubr.bf16.mxu0 0
      %1400 = vmatmul.mubr.bf16.gmra.mrb[0].mxu0 %v1152
      %v1401 = vpop.f32.mrb[0].mxu0
      %v1402 = vadd.f32 %v1064, %v1401
      %v1403 = vpop.f32.mrb[0].mxu0
      %v1404 = vpop.f32.mrb[0].mxu0
      %v1405 = vadd.f32 %v1064, %v1404
      %v1406 = vpop.f32.mrb[0].mxu0
      %1407 = vmatprep.mubr.bf16.mxu0 0
      %1408 = vmatmul.mubr.bf16.gmra.mrb[0].mxu0 %v1155
      %v1409 = vpop.f32.mrb[0].mxu0
      %v1410 = vadd.f32 %v1064, %v1409
      %v1411 = vpop.f32.mrb[0].mxu0
      %v1412 = vpop.f32.mrb[0].mxu0
      %v1413 = vadd.f32 %v1064, %v1412
      %v1414 = vpop.f32.mrb[0].mxu0
      %1415 = vmatprep.mubr.bf16.mxu0 0
      %1416 = vmatmul.mubr.bf16.gmra.mrb[0].mxu0 %v1158
      %v1417 = vpop.f32.mrb[0].mxu0
      %v1418 = vadd.f32 %v1064, %v1417
      %v1419 = vpop.f32.mrb[0].mxu0
      %v1420 = vpop.f32.mrb[0].mxu0
      %v1421 = vadd.f32 %v1064, %v1420
      %v1422 = vpop.f32.mrb[0].mxu0
      %1423 = vmatprep.mubr.bf16.mxu0 0
      %1424 = vmatmul.mubr.bf16.gmra.mrb[0].mxu0 %v1161
      %v1425 = vpop.f32.mrb[0].mxu0
      %v1426 = vadd.f32 %v1064, %v1425
      %v1427 = vpop.f32.mrb[0].mxu0
      %v1428 = vpop.f32.mrb[0].mxu0
      %v1429 = vadd.f32 %v1064, %v1428
      %v1430 = vpop.f32.mrb[0].mxu0
      %1431 = vmatprep.mubr.bf16.mxu0 0
      %1432 = vmatmul.mubr.bf16.gmra.mrb[0].mxu0 %v1164
      %v1433 = vpop.f32.mrb[0].mxu0
      %v1434 = vadd.f32 %v1064, %v1433
      %v1435 = vpop.f32.mrb[0].mxu0
      %v1436 = vpop.f32.mrb[0].mxu0
      %v1437 = vadd.f32 %v1064, %v1436
      %v1438 = vpop.f32.mrb[0].mxu0
      %1439 = vmatprep.mubr.bf16.mxu0 0
      %1440 = vmatmul.mubr.bf16.gmra.mrb[0].mxu0 %v1167
      %v1441 = vpop.f32.mrb[0].mxu0
      %v1442 = vadd.f32 %v1064, %v1441
      %v1443 = vpop.f32.mrb[0].mxu0
      %v1444 = vpop.f32.mrb[0].mxu0
      %v1445 = vadd.f32 %v1064, %v1444
      %v1446 = vpop.f32.mrb[0].mxu0
      %1447 = vmatprep.mubr.bf16.mxu0 0
      %1448 = vmatmul.mubr.bf16.gmra.mrb[0].mxu0 %v1170
      %v1449 = vpop.f32.mrb[0].mxu0
      %v1450 = vadd.f32 %v1064, %v1449
      %v1451 = vpop.f32.mrb[0].mxu0
      %v1452 = vpop.f32.mrb[0].mxu0
      %v1453 = vadd.f32 %v1064, %v1452
      %v1454 = vpop.f32.mrb[0].mxu0
      %1455 = vmatprep.mubr.bf16.mxu0 0
      %1456 = vmatmul.mubr.bf16.gmra.mrb[0].mxu0 %v1173
      %v1457 = vpop.f32.mrb[0].mxu0
      %v1458 = vadd.f32 %v1064, %v1457
      %v1459 = vpop.f32.mrb[0].mxu0
      %v1460 = vpop.f32.mrb[0].mxu0
      %v1461 = vadd.f32 %v1064, %v1460
      %v1462 = vpop.f32.mrb[0].mxu0
      %1463 = vdwg.mxu0
      %vm1464 = vcmask 523264
      %v1465 = vsel %vm1464, %v1210, -inf
      %v1466 = vrot.slane %v1465, 4
      %v1467 = vmax.f32 %v1465, %v1466
      %v1468 = vrot.slane %v1467, 2
      %v1469 = vmax.f32 %v1467, %v1468
      %v1470 = vrot.slane %v1469, 1
      %v1471 = vmax.f32 %v1469, %v1470
      %v1472 = vsel %vm1464, %v1213, -inf
      %v1473 = vrot.slane %v1472, 4
      %v1474 = vmax.f32 %v1472, %v1473
      %v1475 = vrot.slane %v1474, 2
      %v1476 = vmax.f32 %v1474, %v1475
      %v1477 = vrot.slane %v1476, 1
      %v1478 = vmax.f32 %v1476, %v1477
      %v1479 = vsel %vm1464, %v1218, -inf
      %v1480 = vrot.slane %v1479, 4
      %v1481 = vmax.f32 %v1479, %v1480
      %v1482 = vrot.slane %v1481, 2
      %v1483 = vmax.f32 %v1481, %v1482
      %v1484 = vrot.slane %v1483, 1
      %v1485 = vmax.f32 %v1483, %v1484
      %v1486 = vsel %vm1464, %v1221, -inf
      %v1487 = vrot.slane %v1486, 4
      %v1488 = vmax.f32 %v1486, %v1487
      %v1489 = vrot.slane %v1488, 2
      %v1490 = vmax.f32 %v1488, %v1489
      %v1491 = vrot.slane %v1490, 1
      %v1492 = vmax.f32 %v1490, %v1491
      %v1493 = vsel %vm1464, %v1226, -inf
      %v1494 = vrot.slane %v1493, 4
      %v1495 = vmax.f32 %v1493, %v1494
      %v1496 = vrot.slane %v1495, 2
      %v1497 = vmax.f32 %v1495, %v1496
      %v1498 = vrot.slane %v1497, 1
      %v1499 = vmax.f32 %v1497, %v1498
      %v1500 = vsel %vm1464, %v1229, -inf
      %v1501 = vrot.slane %v1500, 4
      %v1502 = vmax.f32 %v1500, %v1501
      %v1503 = vrot.slane %v1502, 2
      %v1504 = vmax.f32 %v1502, %v1503
      %v1505 = vrot.slane %v1504, 1
      %v1506 = vmax.f32 %v1504, %v1505
      %v1507 = vsel %vm1464, %v1234, -inf
      %v1508 = vrot.slane %v1507, 4
      %v1509 = vmax.f32 %v1507, %v1508
      %v1510 = vrot.slane %v1509, 2
      %v1511 = vmax.f32 %v1509, %v1510
      %v1512 = vrot.slane %v1511, 1
      %v1513 = vmax.f32 %v1511, %v1512
      %v1514 = vsel %vm1464, %v1237, -inf
      %v1515 = vrot.slane %v1514, 4
      %v1516 = vmax.f32 %v1514, %v1515
      %v1517 = vrot.slane %v1516, 2
      %v1518 = vmax.f32 %v1516, %v1517
      %v1519 = vrot.slane %v1518, 1
      %v1520 = vmax.f32 %v1518, %v1519
      %v1521 = vsel %vm1464, %v1242, -inf
      %v1522 = vrot.slane %v1521, 4
      %v1523 = vmax.f32 %v1521, %v1522
      %v1524 = vrot.slane %v1523, 2
      %v1525 = vmax.f32 %v1523, %v1524
      %v1526 = vrot.slane %v1525, 1
      %v1527 = vmax.f32 %v1525, %v1526
      %v1528 = vsel %vm1464, %v1245, -inf
      %v1529 = vrot.slane %v1528, 4
      %v1530 = vmax.f32 %v1528, %v1529
      %v1531 = vrot.slane %v1530, 2
      %v1532 = vmax.f32 %v1530, %v1531
      %v1533 = vrot.slane %v1532, 1
      %v1534 = vmax.f32 %v1532, %v1533
      %v1535 = vsel %vm1464, %v1250, -inf
      %v1536 = vrot.slane %v1535, 4
      %v1537 = vmax.f32 %v1535, %v1536
      %v1538 = vrot.slane %v1537, 2
      %v1539 = vmax.f32 %v1537, %v1538
      %v1540 = vrot.slane %v1539, 1
      %v1541 = vmax.f32 %v1539, %v1540
      %v1542 = vsel %vm1464, %v1253, -inf
      %v1543 = vrot.slane %v1542, 4
      %v1544 = vmax.f32 %v1542, %v1543
      %v1545 = vrot.slane %v1544, 2
      %v1546 = vmax.f32 %v1544, %v1545
      %v1547 = vrot.slane %v1546, 1
      %v1548 = vmax.f32 %v1546, %v1547
      %v1549 = vsel %vm1464, %v1258, -inf
      %v1550 = vrot.slane %v1549, 4
      %v1551 = vmax.f32 %v1549, %v1550
      %v1552 = vrot.slane %v1551, 2
      %v1553 = vmax.f32 %v1551, %v1552
      %v1554 = vrot.slane %v1553, 1
      %v1555 = vmax.f32 %v1553, %v1554
      %v1556 = vsel %vm1464, %v1261, -inf
      %v1557 = vrot.slane %v1556, 4
      %v1558 = vmax.f32 %v1556, %v1557
      %v1559 = vrot.slane %v1558, 2
      %v1560 = vmax.f32 %v1558, %v1559
      %v1561 = vrot.slane %v1560, 1
      %v1562 = vmax.f32 %v1560, %v1561
      %v1563 = vsel %vm1464, %v1266, -inf
      %v1564 = vrot.slane %v1563, 4
      %v1565 = vmax.f32 %v1563, %v1564
      %v1566 = vrot.slane %v1565, 2
      %v1567 = vmax.f32 %v1565, %v1566
      %v1568 = vrot.slane %v1567, 1
      %v1569 = vmax.f32 %v1567, %v1568
      %v1570 = vsel %vm1464, %v1269, -inf
      %v1571 = vrot.slane %v1570, 4
      %v1572 = vmax.f32 %v1570, %v1571
      %v1573 = vrot.slane %v1572, 2
      %v1574 = vmax.f32 %v1572, %v1573
      %v1575 = vrot.slane %v1574, 1
      %v1576 = vmax.f32 %v1574, %v1575
      %v1577 = vsel %vm1464, %v1274, -inf
      %v1578 = vrot.slane %v1577, 4
      %v1579 = vmax.f32 %v1577, %v1578
      %v1580 = vrot.slane %v1579, 2
      %v1581 = vmax.f32 %v1579, %v1580
      %v1582 = vrot.slane %v1581, 1
      %v1583 = vmax.f32 %v1581, %v1582
      %v1584 = vsel %vm1464, %v1277, -inf
      %v1585 = vrot.slane %v1584, 4
      %v1586 = vmax.f32 %v1584, %v1585
      %v1587 = vrot.slane %v1586, 2
      %v1588 = vmax.f32 %v1586, %v1587
      %v1589 = vrot.slane %v1588, 1
      %v1590 = vmax.f32 %v1588, %v1589
      %v1591 = vsel %vm1464, %v1282, -inf
      %v1592 = vrot.slane %v1591, 4
      %v1593 = vmax.f32 %v1591, %v1592
      %v1594 = vrot.slane %v1593, 2
      %v1595 = vmax.f32 %v1593, %v1594
      %v1596 = vrot.slane %v1595, 1
      %v1597 = vmax.f32 %v1595, %v1596
      %v1598 = vsel %vm1464, %v1285, -inf
      %v1599 = vrot.slane %v1598, 4
      %v1600 = vmax.f32 %v1598, %v1599
      %v1601 = vrot.slane %v1600, 2
      %v1602 = vmax.f32 %v1600, %v1601
      %v1603 = vrot.slane %v1602, 1
      %v1604 = vmax.f32 %v1602, %v1603
      %v1605 = vsel %vm1464, %v1290, -inf
      %v1606 = vrot.slane %v1605, 4
      %v1607 = vmax.f32 %v1605, %v1606
      %v1608 = vrot.slane %v1607, 2
      %v1609 = vmax.f32 %v1607, %v1608
      %v1610 = vrot.slane %v1609, 1
      %v1611 = vmax.f32 %v1609, %v1610
      %v1612 = vsel %vm1464, %v1293, -inf
      %v1613 = vrot.slane %v1612, 4
      %v1614 = vmax.f32 %v1612, %v1613
      %v1615 = vrot.slane %v1614, 2
      %v1616 = vmax.f32 %v1614, %v1615
      %v1617 = vrot.slane %v1616, 1
      %v1618 = vmax.f32 %v1616, %v1617
      %v1619 = vsel %vm1464, %v1298, -inf
      %v1620 = vrot.slane %v1619, 4
      %v1621 = vmax.f32 %v1619, %v1620
      %v1622 = vrot.slane %v1621, 2
      %v1623 = vmax.f32 %v1621, %v1622
      %v1624 = vrot.slane %v1623, 1
      %v1625 = vmax.f32 %v1623, %v1624
      %v1626 = vsel %vm1464, %v1301, -inf
      %v1627 = vrot.slane %v1626, 4
      %v1628 = vmax.f32 %v1626, %v1627
      %v1629 = vrot.slane %v1628, 2
      %v1630 = vmax.f32 %v1628, %v1629
      %v1631 = vrot.slane %v1630, 1
      %v1632 = vmax.f32 %v1630, %v1631
      %v1633 = vsel %vm1464, %v1306, -inf
      %v1634 = vrot.slane %v1633, 4
      %v1635 = vmax.f32 %v1633, %v1634
      %v1636 = vrot.slane %v1635, 2
      %v1637 = vmax.f32 %v1635, %v1636
      %v1638 = vrot.slane %v1637, 1
      %v1639 = vmax.f32 %v1637, %v1638
      %v1640 = vsel %vm1464, %v1309, -inf
      %v1641 = vrot.slane %v1640, 4
      %v1642 = vmax.f32 %v1640, %v1641
      %v1643 = vrot.slane %v1642, 2
      %v1644 = vmax.f32 %v1642, %v1643
      %v1645 = vrot.slane %v1644, 1
      %v1646 = vmax.f32 %v1644, %v1645
      %v1647 = vsel %vm1464, %v1314, -inf
      %v1648 = vrot.slane %v1647, 4
      %v1649 = vmax.f32 %v1647, %v1648
      %v1650 = vrot.slane %v1649, 2
      %v1651 = vmax.f32 %v1649, %v1650
      %v1652 = vrot.slane %v1651, 1
      %v1653 = vmax.f32 %v1651, %v1652
      %v1654 = vsel %vm1464, %v1317, -inf
      %v1655 = vrot.slane %v1654, 4
      %v1656 = vmax.f32 %v1654, %v1655
      %v1657 = vrot.slane %v1656, 2
      %v1658 = vmax.f32 %v1656, %v1657
      %v1659 = vrot.slane %v1658, 1
      %v1660 = vmax.f32 %v1658, %v1659
      %v1661 = vsel %vm1464, %v1322, -inf
      %v1662 = vrot.slane %v1661, 4
      %v1663 = vmax.f32 %v1661, %v1662
      %v1664 = vrot.slane %v1663, 2
      %v1665 = vmax.f32 %v1663, %v1664
      %v1666 = vrot.slane %v1665, 1
      %v1667 = vmax.f32 %v1665, %v1666
      %v1668 = vsel %vm1464, %v1325, -inf
      %v1669 = vrot.slane %v1668, 4
      %v1670 = vmax.f32 %v1668, %v1669
      %v1671 = vrot.slane %v1670, 2
      %v1672 = vmax.f32 %v1670, %v1671
      %v1673 = vrot.slane %v1672, 1
      %v1674 = vmax.f32 %v1672, %v1673
      %v1675 = vsel %vm1464, %v1330, -inf
      %v1676 = vrot.slane %v1675, 4
      %v1677 = vmax.f32 %v1675, %v1676
      %v1678 = vrot.slane %v1677, 2
      %v1679 = vmax.f32 %v1677, %v1678
      %v1680 = vrot.slane %v1679, 1
      %v1681 = vmax.f32 %v1679, %v1680
      %v1682 = vsel %vm1464, %v1333, -inf
      %v1683 = vrot.slane %v1682, 4
      %v1684 = vmax.f32 %v1682, %v1683
      %v1685 = vrot.slane %v1684, 2
      %v1686 = vmax.f32 %v1684, %v1685
      %v1687 = vrot.slane %v1686, 1
      %v1688 = vmax.f32 %v1686, %v1687
      %v1689 = vsel %vm1464, %v1338, -inf
      %v1690 = vrot.slane %v1689, 4
      %v1691 = vmax.f32 %v1689, %v1690
      %v1692 = vrot.slane %v1691, 2
      %v1693 = vmax.f32 %v1691, %v1692
      %v1694 = vrot.slane %v1693, 1
      %v1695 = vmax.f32 %v1693, %v1694
      %v1696 = vsel %vm1464, %v1341, -inf
      %v1697 = vrot.slane %v1696, 4
      %v1698 = vmax.f32 %v1696, %v1697
      %v1699 = vrot.slane %v1698, 2
      %v1700 = vmax.f32 %v1698, %v1699
      %v1701 = vrot.slane %v1700, 1
      %v1702 = vmax.f32 %v1700, %v1701
      %v1703 = vsel %vm1464, %v1346, -inf
      %v1704 = vrot.slane %v1703, 4
      %v1705 = vmax.f32 %v1703, %v1704
      %v1706 = vrot.slane %v1705, 2
      %v1707 = vmax.f32 %v1705, %v1706
      %v1708 = vrot.slane %v1707, 1
      %v1709 = vmax.f32 %v1707, %v1708
      %v1710 = vsel %vm1464, %v1349, -inf
      %v1711 = vrot.slane %v1710, 4
      %v1712 = vmax.f32 %v1710, %v1711
      %v1713 = vrot.slane %v1712, 2
      %v1714 = vmax.f32 %v1712, %v1713
      %v1715 = vrot.slane %v1714, 1
      %v1716 = vmax.f32 %v1714, %v1715
      %v1717 = vsel %vm1464, %v1354, -inf
      %v1718 = vrot.slane %v1717, 4
      %v1719 = vmax.f32 %v1717, %v1718
      %v1720 = vrot.slane %v1719, 2
      %v1721 = vmax.f32 %v1719, %v1720
      %v1722 = vrot.slane %v1721, 1
      %v1723 = vmax.f32 %v1721, %v1722
      %v1724 = vsel %vm1464, %v1357, -inf
      %v1725 = vrot.slane %v1724, 4
      %v1726 = vmax.f32 %v1724, %v1725
      %v1727 = vrot.slane %v1726, 2
      %v1728 = vmax.f32 %v1726, %v1727
      %v1729 = vrot.slane %v1728, 1
      %v1730 = vmax.f32 %v1728, %v1729
      %v1731 = vsel %vm1464, %v1362, -inf
      %v1732 = vrot.slane %v1731, 4
      %v1733 = vmax.f32 %v1731, %v1732
      %v1734 = vrot.slane %v1733, 2
      %v1735 = vmax.f32 %v1733, %v1734
      %v1736 = vrot.slane %v1735, 1
      %v1737 = vmax.f32 %v1735, %v1736
      %v1738 = vsel %vm1464, %v1365, -inf
      %v1739 = vrot.slane %v1738, 4
      %v1740 = vmax.f32 %v1738, %v1739
      %v1741 = vrot.slane %v1740, 2
      %v1742 = vmax.f32 %v1740, %v1741
      %v1743 = vrot.slane %v1742, 1
      %v1744 = vmax.f32 %v1742, %v1743
      %v1745 = vsel %vm1464, %v1370, -inf
      %v1746 = vrot.slane %v1745, 4
      %v1747 = vmax.f32 %v1745, %v1746
      %v1748 = vrot.slane %v1747, 2
      %v1749 = vmax.f32 %v1747, %v1748
      %v1750 = vrot.slane %v1749, 1
      %v1751 = vmax.f32 %v1749, %v1750
      %v1752 = vsel %vm1464, %v1373, -inf
      %v1753 = vrot.slane %v1752, 4
      %v1754 = vmax.f32 %v1752, %v1753
      %v1755 = vrot.slane %v1754, 2
      %v1756 = vmax.f32 %v1754, %v1755
      %v1757 = vrot.slane %v1756, 1
      %v1758 = vmax.f32 %v1756, %v1757
      %v1759 = vsel %vm1464, %v1378, -inf
      %v1760 = vrot.slane %v1759, 4
      %v1761 = vmax.f32 %v1759, %v1760
      %v1762 = vrot.slane %v1761, 2
      %v1763 = vmax.f32 %v1761, %v1762
      %v1764 = vrot.slane %v1763, 1
      %v1765 = vmax.f32 %v1763, %v1764
      %v1766 = vsel %vm1464, %v1381, -inf
      %v1767 = vrot.slane %v1766, 4
      %v1768 = vmax.f32 %v1766, %v1767
      %v1769 = vrot.slane %v1768, 2
      %v1770 = vmax.f32 %v1768, %v1769
      %v1771 = vrot.slane %v1770, 1
      %v1772 = vmax.f32 %v1770, %v1771
      %v1773 = vsel %vm1464, %v1386, -inf
      %v1774 = vrot.slane %v1773, 4
      %v1775 = vmax.f32 %v1773, %v1774
      %v1776 = vrot.slane %v1775, 2
      %v1777 = vmax.f32 %v1775, %v1776
      %v1778 = vrot.slane %v1777, 1
      %v1779 = vmax.f32 %v1777, %v1778
      %v1780 = vsel %vm1464, %v1389, -inf
      %v1781 = vrot.slane %v1780, 4
      %v1782 = vmax.f32 %v1780, %v1781
      %v1783 = vrot.slane %v1782, 2
      %v1784 = vmax.f32 %v1782, %v1783
      %v1785 = vrot.slane %v1784, 1
      %v1786 = vmax.f32 %v1784, %v1785
      %v1787 = vsel %vm1464, %v1394, -inf
      %v1788 = vrot.slane %v1787, 4
      %v1789 = vmax.f32 %v1787, %v1788
      %v1790 = vrot.slane %v1789, 2
      %v1791 = vmax.f32 %v1789, %v1790
      %v1792 = vrot.slane %v1791, 1
      %v1793 = vmax.f32 %v1791, %v1792
      %v1794 = vsel %vm1464, %v1397, -inf
      %v1795 = vrot.slane %v1794, 4
      %v1796 = vmax.f32 %v1794, %v1795
      %v1797 = vrot.slane %v1796, 2
      %v1798 = vmax.f32 %v1796, %v1797
      %v1799 = vrot.slane %v1798, 1
      %v1800 = vmax.f32 %v1798, %v1799
      %v1801 = vsel %vm1464, %v1402, -inf
      %v1802 = vrot.slane %v1801, 4
      %v1803 = vmax.f32 %v1801, %v1802
      %v1804 = vrot.slane %v1803, 2
      %v1805 = vmax.f32 %v1803, %v1804
      %v1806 = vrot.slane %v1805, 1
      %v1807 = vmax.f32 %v1805, %v1806
      %v1808 = vsel %vm1464, %v1405, -inf
      %v1809 = vrot.slane %v1808, 4
      %v1810 = vmax.f32 %v1808, %v1809
      %v1811 = vrot.slane %v1810, 2
      %v1812 = vmax.f32 %v1810, %v1811
      %v1813 = vrot.slane %v1812, 1
      %v1814 = vmax.f32 %v1812, %v1813
      %v1815 = vsel %vm1464, %v1410, -inf
      %v1816 = vrot.slane %v1815, 4
      %v1817 = vmax.f32 %v1815, %v1816
      %v1818 = vrot.slane %v1817, 2
      %v1819 = vmax.f32 %v1817, %v1818
      %v1820 = vrot.slane %v1819, 1
      %v1821 = vmax.f32 %v1819, %v1820
      %v1822 = vsel %vm1464, %v1413, -inf
      %v1823 = vrot.slane %v1822, 4
      %v1824 = vmax.f32 %v1822, %v1823
      %v1825 = vrot.slane %v1824, 2
      %v1826 = vmax.f32 %v1824, %v1825
      %v1827 = vrot.slane %v1826, 1
      %v1828 = vmax.f32 %v1826, %v1827
      %v1829 = vsel %vm1464, %v1418, -inf
      %v1830 = vrot.slane %v1829, 4
      %v1831 = vmax.f32 %v1829, %v1830
      %v1832 = vrot.slane %v1831, 2
      %v1833 = vmax.f32 %v1831, %v1832
      %v1834 = vrot.slane %v1833, 1
      %v1835 = vmax.f32 %v1833, %v1834
      %v1836 = vsel %vm1464, %v1421, -inf
      %v1837 = vrot.slane %v1836, 4
      %v1838 = vmax.f32 %v1836, %v1837
      %v1839 = vrot.slane %v1838, 2
      %v1840 = vmax.f32 %v1838, %v1839
      %v1841 = vrot.slane %v1840, 1
      %v1842 = vmax.f32 %v1840, %v1841
      %v1843 = vsel %vm1464, %v1426, -inf
      %v1844 = vrot.slane %v1843, 4
      %v1845 = vmax.f32 %v1843, %v1844
      %v1846 = vrot.slane %v1845, 2
      %v1847 = vmax.f32 %v1845, %v1846
      %v1848 = vrot.slane %v1847, 1
      %v1849 = vmax.f32 %v1847, %v1848
      %v1850 = vsel %vm1464, %v1429, -inf
      %v1851 = vrot.slane %v1850, 4
      %v1852 = vmax.f32 %v1850, %v1851
      %v1853 = vrot.slane %v1852, 2
      %v1854 = vmax.f32 %v1852, %v1853
      %v1855 = vrot.slane %v1854, 1
      %v1856 = vmax.f32 %v1854, %v1855
      %v1857 = vsel %vm1464, %v1434, -inf
      %v1858 = vrot.slane %v1857, 4
      %v1859 = vmax.f32 %v1857, %v1858
      %v1860 = vrot.slane %v1859, 2
      %v1861 = vmax.f32 %v1859, %v1860
      %v1862 = vrot.slane %v1861, 1
      %v1863 = vmax.f32 %v1861, %v1862
      %v1864 = vsel %vm1464, %v1437, -inf
      %v1865 = vrot.slane %v1864, 4
      %v1866 = vmax.f32 %v1864, %v1865
      %v1867 = vrot.slane %v1866, 2
      %v1868 = vmax.f32 %v1866, %v1867
      %v1869 = vrot.slane %v1868, 1
      %v1870 = vmax.f32 %v1868, %v1869
      %v1871 = vsel %vm1464, %v1442, -inf
      %v1872 = vrot.slane %v1871, 4
      %v1873 = vmax.f32 %v1871, %v1872
      %v1874 = vrot.slane %v1873, 2
      %v1875 = vmax.f32 %v1873, %v1874
      %v1876 = vrot.slane %v1875, 1
      %v1877 = vmax.f32 %v1875, %v1876
      %v1878 = vsel %vm1464, %v1445, -inf
      %v1879 = vrot.slane %v1878, 4
      %v1880 = vmax.f32 %v1878, %v1879
      %v1881 = vrot.slane %v1880, 2
      %v1882 = vmax.f32 %v1880, %v1881
      %v1883 = vrot.slane %v1882, 1
      %v1884 = vmax.f32 %v1882, %v1883
      %v1885 = vsel %vm1464, %v1450, -inf
      %v1886 = vrot.slane %v1885, 4
      %v1887 = vmax.f32 %v1885, %v1886
      %v1888 = vrot.slane %v1887, 2
      %v1889 = vmax.f32 %v1887, %v1888
      %v1890 = vrot.slane %v1889, 1
      %v1891 = vmax.f32 %v1889, %v1890
      %v1892 = vsel %vm1464, %v1453, -inf
      %v1893 = vrot.slane %v1892, 4
      %v1894 = vmax.f32 %v1892, %v1893
      %v1895 = vrot.slane %v1894, 2
      %v1896 = vmax.f32 %v1894, %v1895
      %v1897 = vrot.slane %v1896, 1
      %v1898 = vmax.f32 %v1896, %v1897
      %v1899 = vsel %vm1464, %v1458, -inf
      %v1900 = vrot.slane %v1899, 4
      %v1901 = vmax.f32 %v1899, %v1900
      %v1902 = vrot.slane %v1901, 2
      %v1903 = vmax.f32 %v1901, %v1902
      %v1904 = vrot.slane %v1903, 1
      %v1905 = vmax.f32 %v1903, %v1904
      %v1906 = vsel %vm1464, %v1461, -inf
      %v1907 = vrot.slane %v1906, 4
      %v1908 = vmax.f32 %v1906, %v1907
      %v1909 = vrot.slane %v1908, 2
      %v1910 = vmax.f32 %v1908, %v1909
      %v1911 = vrot.slane %v1910, 1
      %v1912 = vmax.f32 %v1910, %v1911
      %v1913 = vpack.c.bf16 %v1471, %v1471
      %v1914 = vpack.c.bf16 %v1478, %v1478
      %v1915 = vpack.c.bf16 %v1485, %v1485
      %v1916 = vpack.c.bf16 %v1492, %v1492
      %v1917 = vpack.c.bf16 %v1499, %v1499
      %v1918 = vpack.c.bf16 %v1506, %v1506
      %v1919 = vpack.c.bf16 %v1513, %v1513
      %v1920 = vpack.c.bf16 %v1520, %v1520
      %v1921 = vpack.c.bf16 %v1527, %v1527
      %v1922 = vpack.c.bf16 %v1534, %v1534
      %v1923 = vpack.c.bf16 %v1541, %v1541
      %v1924 = vpack.c.bf16 %v1548, %v1548
      %v1925 = vpack.c.bf16 %v1555, %v1555
      %v1926 = vpack.c.bf16 %v1562, %v1562
      %v1927 = vpack.c.bf16 %v1569, %v1569
      %v1928 = vpack.c.bf16 %v1576, %v1576
      %v1929 = vpack.c.bf16 %v1583, %v1583
      %v1930 = vpack.c.bf16 %v1590, %v1590
      %v1931 = vpack.c.bf16 %v1597, %v1597
      %v1932 = vpack.c.bf16 %v1604, %v1604
      %v1933 = vpack.c.bf16 %v1611, %v1611
      %v1934 = vpack.c.bf16 %v1618, %v1618
      %v1935 = vpack.c.bf16 %v1625, %v1625
      %v1936 = vpack.c.bf16 %v1632, %v1632
      %v1937 = vpack.c.bf16 %v1639, %v1639
      %v1938 = vpack.c.bf16 %v1646, %v1646
      %v1939 = vpack.c.bf16 %v1653, %v1653
      %v1940 = vpack.c.bf16 %v1660, %v1660
      %v1941 = vpack.c.bf16 %v1667, %v1667
      %v1942 = vpack.c.bf16 %v1674, %v1674
      %v1943 = vpack.c.bf16 %v1681, %v1681
      %v1944 = vpack.c.bf16 %v1688, %v1688
      %v1945 = vpack.c.bf16 %v1695, %v1695
      %v1946 = vpack.c.bf16 %v1702, %v1702
      %v1947 = vpack.c.bf16 %v1709, %v1709
      %v1948 = vpack.c.bf16 %v1716, %v1716
      %v1949 = vpack.c.bf16 %v1723, %v1723
      %v1950 = vpack.c.bf16 %v1730, %v1730
      %v1951 = vpack.c.bf16 %v1737, %v1737
      %v1952 = vpack.c.bf16 %v1744, %v1744
      %v1953 = vpack.c.bf16 %v1751, %v1751
      %v1954 = vpack.c.bf16 %v1758, %v1758
      %v1955 = vpack.c.bf16 %v1765, %v1765
      %v1956 = vpack.c.bf16 %v1772, %v1772
      %v1957 = vpack.c.bf16 %v1779, %v1779
      %v1958 = vpack.c.bf16 %v1786, %v1786
      %v1959 = vpack.c.bf16 %v1793, %v1793
      %v1960 = vpack.c.bf16 %v1800, %v1800
      %v1961 = vpack.c.bf16 %v1807, %v1807
      %v1962 = vpack.c.bf16 %v1814, %v1814
      %v1963 = vpack.c.bf16 %v1821, %v1821
      %v1964 = vpack.c.bf16 %v1828, %v1828
      %v1965 = vpack.c.bf16 %v1835, %v1835
      %v1966 = vpack.c.bf16 %v1842, %v1842
      %v1967 = vpack.c.bf16 %v1849, %v1849
      %v1968 = vpack.c.bf16 %v1856, %v1856
      %v1969 = vpack.c.bf16 %v1863, %v1863
      %v1970 = vpack.c.bf16 %v1870, %v1870
      %v1971 = vpack.c.bf16 %v1877, %v1877
      %v1972 = vpack.c.bf16 %v1884, %v1884
      %v1973 = vpack.c.bf16 %v1891, %v1891
      %v1974 = vpack.c.bf16 %v1898, %v1898
      %v1975 = vpack.c.bf16 %v1905, %v1905
      %v1976 = vpack.c.bf16 %v1912, %v1912
      %v1977 = vld [vmem:[%s5] sm:$0xf]
      %v1978 = vld [vmem:[%s5 + $0x4] sm:$0xf]
      %v1979 = vld [vmem:[%s5 + $0x8] sm:$0xf]
      %v1980 = vld [vmem:[%s5 + $0xc] sm:$0xf]
      %v1981 = vld [vmem:[%s5 + $0x10] sm:$0xf]
      %v1982 = vld [vmem:[%s5 + $0x14] sm:$0xf]
      %v1983 = vld [vmem:[%s5 + $0x18] sm:$0xf]
      %v1984 = vld [vmem:[%s5 + $0x1c] sm:$0xf]
      %v1985 = vld [vmem:[%s6] sm:$0x1]
      %v1987 = vlaneseq
      %v1988 = vshrl.u32 %v1987, 7
      %v1989 = vsub.s32 0, %v1988
      %v1990 = vrot.slane %v1985, %v1989
      %v2056 = vunpack.c.l.b16 %v1913
      %v2057 = vunpack.c.l.b16 %v1914
      %v2058 = vunpack.c.l.b16 %v1915
      %v2059 = vunpack.c.l.b16 %v1916
      %v2060 = vunpack.c.l.b16 %v1917
      %v2061 = vunpack.c.l.b16 %v1918
      %v2062 = vunpack.c.l.b16 %v1919
      %v2063 = vunpack.c.l.b16 %v1920
      %v2064 = vunpack.c.l.b16 %v1921
      %v2065 = vunpack.c.l.b16 %v1922
      %v2066 = vunpack.c.l.b16 %v1923
      %v2067 = vunpack.c.l.b16 %v1924
      %v2068 = vunpack.c.l.b16 %v1925
      %v2069 = vunpack.c.l.b16 %v1926
      %v2070 = vunpack.c.l.b16 %v1927
      %v2071 = vunpack.c.l.b16 %v1928
      %v2072 = vunpack.c.l.b16 %v1929
      %v2073 = vunpack.c.l.b16 %v1930
      %v2074 = vunpack.c.l.b16 %v1931
      %v2075 = vunpack.c.l.b16 %v1932
      %v2076 = vunpack.c.l.b16 %v1933
      %v2077 = vunpack.c.l.b16 %v1934
      %v2078 = vunpack.c.l.b16 %v1935
      %v2079 = vunpack.c.l.b16 %v1936
      %v2080 = vunpack.c.l.b16 %v1937
      %v2081 = vunpack.c.l.b16 %v1938
      %v2082 = vunpack.c.l.b16 %v1939
      %v2083 = vunpack.c.l.b16 %v1940
      %v2084 = vunpack.c.l.b16 %v1941
      %v2085 = vunpack.c.l.b16 %v1942
      %v2086 = vunpack.c.l.b16 %v1943
      %v2087 = vunpack.c.l.b16 %v1944
      %v2088 = vunpack.c.l.b16 %v1945
      %v2089 = vunpack.c.l.b16 %v1946
      %v2090 = vunpack.c.l.b16 %v1947
      %v2091 = vunpack.c.l.b16 %v1948
      %v2092 = vunpack.c.l.b16 %v1949
      %v2093 = vunpack.c.l.b16 %v1950
      %v2094 = vunpack.c.l.b16 %v1951
      %v2095 = vunpack.c.l.b16 %v1952
      %v2096 = vunpack.c.l.b16 %v1953
      %v2097 = vunpack.c.l.b16 %v1954
      %v2098 = vunpack.c.l.b16 %v1955
      %v2099 = vunpack.c.l.b16 %v1956
      %v2100 = vunpack.c.l.b16 %v1957
      %v2101 = vunpack.c.l.b16 %v1958
      %v2102 = vunpack.c.l.b16 %v1959
      %v2103 = vunpack.c.l.b16 %v1960
      %v2104 = vunpack.c.l.b16 %v1961
      %v2105 = vunpack.c.l.b16 %v1962
      %v2106 = vunpack.c.l.b16 %v1963
      %v2107 = vunpack.c.l.b16 %v1964
      %v2108 = vunpack.c.l.b16 %v1965
      %v2109 = vunpack.c.l.b16 %v1966
      %v2110 = vunpack.c.l.b16 %v1967
      %v2111 = vunpack.c.l.b16 %v1968
      %v2112 = vunpack.c.l.b16 %v1969
      %v2113 = vunpack.c.l.b16 %v1970
      %v2114 = vunpack.c.l.b16 %v1971
      %v2115 = vunpack.c.l.b16 %v1972
      %v2116 = vunpack.c.l.b16 %v1973
      %v2117 = vunpack.c.l.b16 %v1974
      %v2118 = vunpack.c.l.b16 %v1975
      %v2119 = vunpack.c.l.b16 %v1976
      %vm2120 = vcmask 1041409
      %v2121 = vsel %vm2120, %v2057, %v2056
      %vm2122 = vcmask 1042434
      %v2123 = vsel %vm2122, %v2058, %v2121
      %vm2124 = vcmask 1043459
      %v2125 = vsel %vm2124, %v2059, %v2123
      %vm2126 = vcmask 1044484
      %v2127 = vsel %vm2126, %v2060, %v2125
      %vm2128 = vcmask 1045509
      %v2129 = vsel %vm2128, %v2061, %v2127
      %vm2130 = vcmask 1046534
      %v2131 = vsel %vm2130, %v2062, %v2129
      %vm2132 = vcmask 1047559
      %v2133 = vsel %vm2132, %v2063, %v2131
      %v2134 = vsel %vm2120, %v2065, %v2064
      %v2135 = vsel %vm2122, %v2066, %v2134
      %v2136 = vsel %vm2124, %v2067, %v2135
      %v2137 = vsel %vm2126, %v2068, %v2136
      %v2138 = vsel %vm2128, %v2069, %v2137
      %v2139 = vsel %vm2130, %v2070, %v2138
      %v2140 = vsel %vm2132, %v2071, %v2139
      %v2141 = vsel %vm2120, %v2073, %v2072
      %v2142 = vsel %vm2122, %v2074, %v2141
      %v2143 = vsel %vm2124, %v2075, %v2142
      %v2144 = vsel %vm2126, %v2076, %v2143
      %v2145 = vsel %vm2128, %v2077, %v2144
      %v2146 = vsel %vm2130, %v2078, %v2145
      %v2147 = vsel %vm2132, %v2079, %v2146
      %v2148 = vsel %vm2120, %v2081, %v2080
      %v2149 = vsel %vm2122, %v2082, %v2148
      %v2150 = vsel %vm2124, %v2083, %v2149
      %v2151 = vsel %vm2126, %v2084, %v2150
      %v2152 = vsel %vm2128, %v2085, %v2151
      %v2153 = vsel %vm2130, %v2086, %v2152
      %v2154 = vsel %vm2132, %v2087, %v2153
      %v2155 = vsel %vm2120, %v2089, %v2088
      %v2156 = vsel %vm2122, %v2090, %v2155
      %v2157 = vsel %vm2124, %v2091, %v2156
      %v2158 = vsel %vm2126, %v2092, %v2157
      %v2159 = vsel %vm2128, %v2093, %v2158
      %v2160 = vsel %vm2130, %v2094, %v2159
      %v2161 = vsel %vm2132, %v2095, %v2160
      %v2162 = vsel %vm2120, %v2097, %v2096
      %v2163 = vsel %vm2122, %v2098, %v2162
      %v2164 = vsel %vm2124, %v2099, %v2163
      %v2165 = vsel %vm2126, %v2100, %v2164
      %v2166 = vsel %vm2128, %v2101, %v2165
      %v2167 = vsel %vm2130, %v2102, %v2166
      %v2168 = vsel %vm2132, %v2103, %v2167
      %v2169 = vsel %vm2120, %v2105, %v2104
      %v2170 = vsel %vm2122, %v2106, %v2169
      %v2171 = vsel %vm2124, %v2107, %v2170
      %v2172 = vsel %vm2126, %v2108, %v2171
      %v2173 = vsel %vm2128, %v2109, %v2172
      %v2174 = vsel %vm2130, %v2110, %v2173
      %v2175 = vsel %vm2132, %v2111, %v2174
      %v2176 = vsel %vm2120, %v2113, %v2112
      %v2177 = vsel %vm2122, %v2114, %v2176
      %v2178 = vsel %vm2124, %v2115, %v2177
      %v2179 = vsel %vm2126, %v2116, %v2178
      %v2180 = vsel %vm2128, %v2117, %v2179
      %v2181 = vsel %vm2130, %v2118, %v2180
      %v2182 = vsel %vm2132, %v2119, %v2181
      %v2183 = vpack.c.b16 %v2140, %v2133
      %v2184 = vpack.c.b16 %v2154, %v2147
      %v2185 = vpack.c.b16 %v2168, %v2161
      %v2186 = vpack.c.b16 %v2182, %v2175
      %v2195 = vunpack.c.l.b16 %v1977
      %v2196 = vunpack.c.l.b16 %v1978
      %v2197 = vunpack.c.l.b16 %v1979
      %v2198 = vunpack.c.l.b16 %v1980
      %v2199 = vunpack.c.l.b16 %v1981
      %v2200 = vunpack.c.l.b16 %v1982
      %v2201 = vunpack.c.l.b16 %v1983
      %v2202 = vunpack.c.l.b16 %v1984
      %v2203 = vpack.c.b16 %v2196, %v2195
      %v2204 = vpack.c.b16 %v2198, %v2197
      %v2205 = vpack.c.b16 %v2200, %v2199
      %v2206 = vpack.c.b16 %v2202, %v2201
      %v2212 = vsel %vm1464, %v2183, 0
      %v2215 = vsel %vm1464, %v2184, 0
      %v2218 = vsel %vm1464, %v2185, 0
      %v2221 = vsel %vm1464, %v2186, 0
      %2223 = vmatprep.subr.bf16.mxu0 0
      %2224 = vmatpush1.bf16.msra.mxu0 %v2203
      %2225 = vmatprep.subr.bf16.mxu0 0
      %2226 = vmatpush1.bf16.msra.mxu0 %v2204
      %2227 = vmatprep.subr.bf16.mxu0 0
      %2228 = vmatpush1.bf16.msra.mxu0 %v2205
      %2229 = vmatprep.subr.bf16.mxu0 0
      %2230 = vmatpush1.bf16.msra.mxu0 %v2206
      %2231 = vmatprep.subr.bf16.mxu0 0
      %2232 = vmatpush1.bf16.msra.mxu0 0
      %2233 = vmatprep.subr.bf16.mxu0 0
      %2234 = vmatpush1.bf16.msra.mxu0 0
      %2235 = vmatprep.subr.bf16.mxu0 0
      %2236 = vmatpush1.bf16.msra.mxu0 0
      %2237 = vmatprep.subr.bf16.mxu0 0
      %2238 = vmatpush1.bf16.msra.mxu0 0
      %2239 = vmatprep.subr.bf16.mxu0 0
      %2240 = vmatpush1.bf16.msra.mxu0 0
      %2241 = vmatprep.subr.bf16.mxu0 0
      %2242 = vmatpush1.bf16.msra.mxu0 0
      %2243 = vmatprep.subr.bf16.mxu0 0
      %2244 = vmatpush1.bf16.msra.mxu0 0
      %2245 = vmatprep.subr.bf16.mxu0 0
      %2246 = vmatpush1.bf16.msra.mxu0 0
      %2247 = vmatprep.subr.bf16.mxu0 0
      %2248 = vmatpush1.bf16.msra.mxu0 0
      %2249 = vmatprep.subr.bf16.mxu0 0
      %2250 = vmatpush1.bf16.msra.mxu0 0
      %2251 = vmatprep.subr.bf16.mxu0 0
      %2252 = vmatpush1.bf16.msra.mxu0 0
      %2253 = vmatprep.subr.bf16.mxu0 0
      %2254 = vmatpush1.bf16.msra.mxu0 0
      %2255 = vmatprep.mubr.bf16.mxu0 0
      %2256 = vmatmul.mubr.bf16.gmra.mrb[0].mxu0 %v2212
      %v2257 = vpop.f32.mrb[0].mxu0
      %v2258 = vadd.f32 %v1990, %v2257
      %v2259 = vpop.f32.mrb[0].mxu0
      %v2260 = vpop.f32.mrb[0].mxu0
      %v2261 = vadd.f32 %v1990, %v2260
      %v2262 = vpop.f32.mrb[0].mxu0
      %2263 = vmatprep.mubr.bf16.mxu0 0
      %2264 = vmatmul.mubr.bf16.gmra.mrb[0].mxu0 %v2215
      %v2265 = vpop.f32.mrb[0].mxu0
      %v2266 = vadd.f32 %v1990, %v2265
      %v2267 = vpop.f32.mrb[0].mxu0
      %v2268 = vpop.f32.mrb[0].mxu0
      %v2269 = vadd.f32 %v1990, %v2268
      %v2270 = vpop.f32.mrb[0].mxu0
      %2271 = vmatprep.mubr.bf16.mxu0 0
      %2272 = vmatmul.mubr.bf16.gmra.mrb[0].mxu0 %v2218
      %v2273 = vpop.f32.mrb[0].mxu0
      %v2274 = vadd.f32 %v1990, %v2273
      %v2275 = vpop.f32.mrb[0].mxu0
      %v2276 = vpop.f32.mrb[0].mxu0
      %v2277 = vadd.f32 %v1990, %v2276
      %v2278 = vpop.f32.mrb[0].mxu0
      %2279 = vmatprep.mubr.bf16.mxu0 0
      %2280 = vmatmul.mubr.bf16.gmra.mrb[0].mxu0 %v2221
      %v2281 = vpop.f32.mrb[0].mxu0
      %v2282 = vadd.f32 %v1990, %v2281
      %v2283 = vpop.f32.mrb[0].mxu0
      %v2284 = vpop.f32.mrb[0].mxu0
      %v2285 = vadd.f32 %v1990, %v2284
      %v2286 = vpop.f32.mrb[0].mxu0
      %2287 = vdwg.mxu0
      %v2288 = vmax.f32 %v2258, 0.0
      %v2289 = vmax.f32 %v2261, 0.0
      %v2290 = vmax.f32 %v2266, 0.0
      %v2291 = vmax.f32 %v2269, 0.0
      %v2292 = vmax.f32 %v2274, 0.0
      %v2293 = vmax.f32 %v2277, 0.0
      %v2294 = vmax.f32 %v2282, 0.0
      %v2295 = vmax.f32 %v2285, 0.0
      %v2296 = vpack.c.bf16 %v2289, %v2288
      %v2297 = vpack.c.bf16 %v2291, %v2290
      %v2298 = vpack.c.bf16 %v2293, %v2292
      %v2299 = vpack.c.bf16 %v2295, %v2294
      %v2300 = vld [vmem:[%s7] sm:$0xf]
      %v2301 = vld [vmem:[%s7 + $0x4] sm:$0xf]
      %v2302 = vld [vmem:[%s7 + $0x8] sm:$0xf]
      %v2303 = vld [vmem:[%s7 + $0xc] sm:$0xf]
      %v2304 = vld [vmem:[%s8] sm:$0x1]
      %v2306 = vlaneseq
      %v2307 = vshrl.u32 %v2306, 7
      %v2308 = vsub.s32 0, %v2307
      %v2309 = vrot.slane %v2304, %v2308
      %v2315 = vunpack.c.l.b16 %v2300
      %v2316 = vunpack.c.l.b16 %v2301
      %v2317 = vunpack.c.l.b16 %v2302
      %v2318 = vunpack.c.l.b16 %v2303
      %v2319 = vpack.c.b16 %v2316, %v2315
      %v2320 = vpack.c.b16 %v2318, %v2317
      %v2324 = vsel %vm1078, %v2296, 0
      %v2327 = vsel %vm1078, %v2297, 0
      %v2330 = vsel %vm1078, %v2298, 0
      %v2333 = vsel %vm1078, %v2299, 0
      %2335 = vmatprep.subr.bf16.mxu0 0
      %2336 = vmatpush1.bf16.msra.mxu0 %v2319
      %2337 = vmatprep.subr.bf16.mxu0 0
      %2338 = vmatpush1.bf16.msra.mxu0 %v2320
      %2339 = vmatprep.subr.bf16.mxu0 0
      %2340 = vmatpush1.bf16.msra.mxu0 0
      %2341 = vmatprep.subr.bf16.mxu0 0
      %2342 = vmatpush1.bf16.msra.mxu0 0
      %2343 = vmatprep.subr.bf16.mxu0 0
      %2344 = vmatpush1.bf16.msra.mxu0 0
      %2345 = vmatprep.subr.bf16.mxu0 0
      %2346 = vmatpush1.bf16.msra.mxu0 0
      %2347 = vmatprep.subr.bf16.mxu0 0
      %2348 = vmatpush1.bf16.msra.mxu0 0
      %2349 = vmatprep.subr.bf16.mxu0 0
      %2350 = vmatpush1.bf16.msra.mxu0 0
      %2351 = vmatprep.subr.bf16.mxu0 0
      %2352 = vmatpush1.bf16.msra.mxu0 0
      %2353 = vmatprep.subr.bf16.mxu0 0
      %2354 = vmatpush1.bf16.msra.mxu0 0
      %2355 = vmatprep.subr.bf16.mxu0 0
      %2356 = vmatpush1.bf16.msra.mxu0 0
      %2357 = vmatprep.subr.bf16.mxu0 0
      %2358 = vmatpush1.bf16.msra.mxu0 0
      %2359 = vmatprep.subr.bf16.mxu0 0
      %2360 = vmatpush1.bf16.msra.mxu0 0
      %2361 = vmatprep.subr.bf16.mxu0 0
      %2362 = vmatpush1.bf16.msra.mxu0 0
      %2363 = vmatprep.subr.bf16.mxu0 0
      %2364 = vmatpush1.bf16.msra.mxu0 0
      %2365 = vmatprep.subr.bf16.mxu0 0
      %2366 = vmatpush1.bf16.msra.mxu0 0
      %2367 = vmatprep.mubr.bf16.mxu0 0
      %2368 = vmatmul.mubr.bf16.gmra.mrb[0].mxu0 %v2324
      %v2369 = vpop.f32.mrb[0].mxu0
      %v2370 = vadd.f32 %v2309, %v2369
      %v2371 = vpop.f32.mrb[0].mxu0
      %v2372 = vpop.f32.mrb[0].mxu0
      %v2373 = vadd.f32 %v2309, %v2372
      %v2374 = vpop.f32.mrb[0].mxu0
      %2375 = vmatprep.mubr.bf16.mxu0 0
      %2376 = vmatmul.mubr.bf16.gmra.mrb[0].mxu0 %v2327
      %v2377 = vpop.f32.mrb[0].mxu0
      %v2378 = vadd.f32 %v2309, %v2377
      %v2379 = vpop.f32.mrb[0].mxu0
      %v2380 = vpop.f32.mrb[0].mxu0
      %v2381 = vadd.f32 %v2309, %v2380
      %v2382 = vpop.f32.mrb[0].mxu0
      %2383 = vmatprep.mubr.bf16.mxu0 0
      %2384 = vmatmul.mubr.bf16.gmra.mrb[0].mxu0 %v2330
      %v2385 = vpop.f32.mrb[0].mxu0
      %v2386 = vadd.f32 %v2309, %v2385
      %v2387 = vpop.f32.mrb[0].mxu0
      %v2388 = vpop.f32.mrb[0].mxu0
      %v2389 = vadd.f32 %v2309, %v2388
      %v2390 = vpop.f32.mrb[0].mxu0
      %2391 = vmatprep.mubr.bf16.mxu0 0
      %2392 = vmatmul.mubr.bf16.gmra.mrb[0].mxu0 %v2333
      %v2393 = vpop.f32.mrb[0].mxu0
      %v2394 = vadd.f32 %v2309, %v2393
      %v2395 = vpop.f32.mrb[0].mxu0
      %v2396 = vpop.f32.mrb[0].mxu0
      %v2397 = vadd.f32 %v2309, %v2396
      %v2398 = vpop.f32.mrb[0].mxu0
      %2399 = vdwg.mxu0
      %vm2400 = vcmask 130048
      %2401 = vst.msk [vmem:[#allocation2] sm:$0xff] %vm2400, %v2370
      %2402 = vst.msk [vmem:[#allocation2 + $0x8] sm:$0xff] %vm2400, %v2373
      %2403 = vst.msk [vmem:[#allocation2 + $0x10] sm:$0xff] %vm2400, %v2378
      %2404 = vst.msk [vmem:[#allocation2 + $0x18] sm:$0xff] %vm2400, %v2381
      %2405 = vst.msk [vmem:[#allocation2 + $0x20] sm:$0xff] %vm2400, %v2386
      %2406 = vst.msk [vmem:[#allocation2 + $0x28] sm:$0xff] %vm2400, %v2389
      %2407 = vst.msk [vmem:[#allocation2 + $0x30] sm:$0xff] %vm2400, %v2394
      %2408 = vst.msk [vmem:[#allocation2 + $0x38] sm:$0xff] %vm2400, %v2397
      %v2409 = vld [vmem:[#allocation2] ss:$2 sm:$0xff]
      %s2410 = scalar_lea.vmem [#allocation2], 16
      %v2411 = vld [vmem:[%s2410] ss:$2 sm:$0xff]
      %s2412 = scalar_lea.vmem [#allocation2], 32
      %v2413 = vld [vmem:[%s2412] ss:$2 sm:$0xff]
      %s2414 = scalar_lea.vmem [#allocation2], 48
      %v2415 = vld [vmem:[%s2414] ss:$2 sm:$0xff]
      %s2416 = scalar_lea.vmem [#allocation2], 1
      %v2417 = vld [vmem:[%s2416] ss:$2 sm:$0xff]
      %s2418 = scalar_lea.vmem [#allocation2], 17
      %v2419 = vld [vmem:[%s2418] ss:$2 sm:$0xff]
      %s2420 = scalar_lea.vmem [#allocation2], 33
      %v2421 = vld [vmem:[%s2420] ss:$2 sm:$0xff]
      %s2422 = scalar_lea.vmem [#allocation2], 49
      %v2423 = vld [vmem:[%s2422] ss:$2 sm:$0xff]
      %v2424 = vmax.f32 %v2409, %v2417
      %v2425 = vmax.f32 %v2411, %v2419
      %v2426 = vmax.f32 %v2413, %v2421
      %v2427 = vmax.f32 %v2415, %v2423
      %2428 = vst.msk [vmem:[%s334] sm:$0xff] %vm2400, %v2424
      %2429 = vst.msk [vmem:[%s334 + $0x8] sm:$0xff] %vm2400, %v2425
      %2430 = vst.msk [vmem:[%s334 + $0x10] sm:$0xff] %vm2400, %v2426
      %2431 = vst.msk [vmem:[%s334 + $0x18] sm:$0xff] %vm2400, %v2427
      %s2432 = smul.u32 4, %s20
      %p2433 = scmp.lt.s32.totalorder %s2432, 7
      %s2434 = scalar_select %p2433, %s2432, 7
      %s2435 = smul.addr %s2434, 8
      %s2436 = scalar_lea.vmem %s9, %s2435
      // Predicated region
      $region57: #{tpu_custom_call.1} parent=55 // pred_check
        %p2437 = pneg %p232
      $region58: #{tpu_custom_call.1} parent=55 // pred_check_branch
        %2439 = sbr.rel (%p2437) target = $region60
      $region59: #{tpu_custom_call.1} parent=55 // pred_region
        %s2440 = smul.u32 4, %s20
      $region60: #{tpu_custom_call.1} parent=55 // pred_fallthru
        _
    $region56: #{tpu_custom_call.1} parent=5 // pred_fallthru
      _
    %p2441 = scmp.le.s32.totalorder 2, %s15
    // Predicated region
    $region61: #{tpu_custom_call.1} parent=5 // pred_check
      %p2442 = pneg %p2441
    $region62: #{tpu_custom_call.1} parent=5 // pred_check_branch
      %2444 = sbr.rel (%p2442) target = $region64
    $region63: #{tpu_custom_call.1} parent=5 // pred_region
      %s2445 = ssub.s32 %s15, 2
      // Predicated region
      $region65: #{tpu_custom_call.1} parent=63 // pred_check
        %p2446 = pneg %p238
      $region66: #{tpu_custom_call.1} parent=63 // pred_check_branch
        %2448 = sbr.rel (%p2446) target = $region68
      $region67: #{tpu_custom_call.1} parent=63 // pred_region
        %s2449 = smul.u32 4, %s21
        %p2450 = scmp.lt.s32.totalorder %s2449, 7
        %s2451 = scalar_select %p2450, %s2449, 7
        %s2452 = smul.addr %s2451, 8
        %s2453 = scalar_lea.vmem %s9, %s2452
      $region68: #{tpu_custom_call.1} parent=63 // pred_fallthru
        _
    $region64: #{tpu_custom_call.1} parent=5 // pred_fallthru
      _
  $region6: #{tpu_custom_call.1} parent=0 // loop_footer
    %s19 = sadd.s32 1, %s15
  $region7: #{tpu_custom_call.1} parent=0 // loop_footer_branch
    %14 = sbr.rel target = $region3
  $region8: #{tpu_custom_call.1} parent=0 // loop_exit
    _

</llo_original>
